<compile_context>
chip_gen: v6e
topology: v6e:2x2x1
jax: 0.10.0
libtpu: 0.0.40
codegen_flags: <defaults>
</compile_context>

<pallas_src>
import functools

import numpy as np

import jax
import jax.numpy as jnp
from jax.experimental import pallas as pl
from jax.experimental.pallas import tpu as pltpu


@functools.lru_cache(maxsize=None)
def _make_tap_masks(H, W):
    """(9, H*W) float32 {0,1} validity masks, one per 3x3 tap (trace-time)."""
    yy, xx = np.meshgrid(np.arange(H), np.arange(W), indexing="ij")
    rows = []
    for ky in range(3):
        for kx in range(3):
            dy, dx = ky - 1, kx - 1
            ok = ((yy + dy >= 0) & (yy + dy < H) &
                  (xx + dx >= 0) & (xx + dx < W))
            rows.append(ok.reshape(-1))
    return np.stack(rows).astype(np.float32)


def _pick_block_batch(B, Cin, Cout, HW, *, min_grid=2, max_block_batch=32,
                      max_vmem_bytes=8 << 20):
    """Largest bb dividing B s.t. grid >= min_grid and the per-step working
    set (x + out double-buffered + patches scratch) stays small vs VMEM."""
    best = 1
    for bb in range(1, B + 1):
        if B % bb:
            continue
        if B // bb < min_grid or bb > max_block_batch:
            break
        vmem = 4 * HW * (2 * bb * Cin + 2 * bb * Cout + 9 * Cin)
        if vmem > max_vmem_bytes:
            break
        best = bb
    return best


def _residual_kernel(x_ref, w3_ref, w1_ref, m_ref, o_ref, patches_ref, *, W):
    # x_ref:       (bb, Cin, H*W)   bb input images, spatial flattened on lanes
    # w3_ref:      (Crh, 9*Cin)     3x3 conv weights, tap-major / cin-minor
    # w1_ref:      (Cout, Crh)      1x1 conv weights
    # m_ref:       (9, H*W)         {0,1} border masks (grid-invariant)
    # o_ref:       (bb, Cout, H*W)
    # patches_ref: (9*Cin, H*W)     VMEM im2col staging buffer (reused per image)
    bb, Cin, HW = x_ref.shape

    # Grid-invariant operands: load / cast once per step (hoisted out of loops).
    w3 = w3_ref[...].astype(jnp.float32)
    w1 = w1_ref[...].astype(jnp.float32)
    masks = m_ref[...]
    mask_rows = [masks[t] for t in range(9)]          # (H*W,) each, static slices

    for bi in range(bb):                              # static unroll (bb <= 32)
        x_i = x_ref[bi].astype(jnp.float32)           # (Cin, HW)
        xr = jnp.maximum(x_i, 0.0)                    # ReLU(x)

        # im2col: 9 shifted+masked copies of ReLU(x), staged in VMEM scratch
        # (tap-major / cin-minor rows to match w3's column layout).
        for t in range(9):
            dy, dx = t // 3 - 1, t % 3 - 1
            s = dy * W + dx                           # flat lane shift
            # shifted[p] = xr[p + s] (circular; border handled by the mask)
            shifted = xr if s == 0 else pltpu.roll(xr, shift=(-s) % HW, axis=1)
            tap = shifted if (dy == 0 and dx == 0) else shifted * mask_rows[t]
            patches_ref[t * Cin:(t + 1) * Cin, :] = tap

        # Conv3x3 as one MXU matmul (K = 9*Cin), ReLU, Conv1x1, residual add.
        h = jnp.dot(w3, patches_ref[...],
                    preferred_element_type=jnp.float32)       # (Crh, HW)
        h = jnp.maximum(h, 0.0)
        y = jnp.dot(w1, h, preferred_element_type=jnp.float32)  # (Cout, HW)

        o_ref[bi] = (x_i + y).astype(o_ref.dtype)


def prepare_weights(w3_oihw, w1_oihw):
    """One-time weight repack (hoisted off the per-forward hot path).

    (Crh, Cin, 3, 3) -> (Crh, 9*Cin) tap-major / cin-minor; (Cout, Crh, 1, 1)
    -> (Cout, Crh)."""
    Crh, Cin = w3_oihw.shape[0], w3_oihw.shape[1]
    w3m = jnp.transpose(w3_oihw, (0, 2, 3, 1)).reshape(Crh, 9 * Cin)
    w1m = w1_oihw[:, :, 0, 0]
    return w3m, w1m


def residual_forward(x_nchw, w3m, w1m, *, block_batch=None):
    """x_nchw: (B, Cin, H, W); w3m: (Crh, 9*Cin); w1m: (Cout, Crh)."""
    B, Cin, H, W = x_nchw.shape
    Crh = w3m.shape[0]
    Cout = w1m.shape[0]
    assert w3m.shape == (Crh, 9 * Cin)
    assert w1m.shape == (Cout, Crh)
    assert Cout == Cin, "Residual add requires num_hiddens == in_channels"
    HW = H * W

    bb = (block_batch if block_batch is not None
          else _pick_block_batch(B, Cin, Cout, HW))
    assert B % bb == 0
    G = B // bb

    # Free reshape only (no transpose / pad passes over HBM).
    x2d = x_nchw.reshape(B, Cin, HW)
    masks = jnp.asarray(_make_tap_masks(H, W))        # (9, HW), trace-time table

    kernel = functools.partial(_residual_kernel, W=W)

    out2d = pl.pallas_call(
        kernel,
        out_shape=jax.ShapeDtypeStruct((B, Cout, HW), x_nchw.dtype),
        grid=(G,),
        in_specs=[
            pl.BlockSpec((bb, Cin, HW), lambda g: (g, 0, 0)),    # x: bb images/step
            pl.BlockSpec((Crh, 9 * Cin), lambda g: (0, 0)),      # w3 (resident)
            pl.BlockSpec((Cout, Crh), lambda g: (0, 0)),         # w1 (resident)
            pl.BlockSpec((9, HW), lambda g: (0, 0)),             # masks (resident)
        ],
        out_specs=pl.BlockSpec((bb, Cout, HW), lambda g: (g, 0, 0)),
        scratch_shapes=[pltpu.VMEM((9 * Cin, HW), jnp.float32)],  # im2col staging
        compiler_params=pltpu.CompilerParams(
            dimension_semantics=("parallel",)),                   # v7x: 2 TCs
    )(x2d, w3m, w1m, masks)

    return out2d.reshape(B, Cout, H, W)


def _reference_forward(x_nchw, w3_oihw, w1_oihw):
    """Pure-JAX reference (lax.conv) for a correctness check."""
    h = jax.nn.relu(x_nchw)
    h = jax.lax.conv_general_dilated(
        h, w3_oihw, window_strides=(1, 1), padding=((1, 1), (1, 1)),
        dimension_numbers=("NCHW", "OIHW", "NCHW"))
    h = jax.nn.relu(h)
    h = jax.lax.conv_general_dilated(
        h, w1_oihw, window_strides=(1, 1), padding="VALID",
        dimension_numbers=("NCHW", "OIHW", "NCHW"))
    return x_nchw + h


if __name__ == "__main__":
    # Module hyperparameters: residual add forces num_hiddens == in_channels.
    # B=8 so the batched grid keeps >= 2 steps (bb=4, grid=(2,)).
    B, Cin, H, W = 8, 8, 16, 16
    num_hiddens = Cin
    num_residual_hiddens = 16

    key = jax.random.PRNGKey(0)
    kx, k3, k1 = jax.random.split(key, 3)

    x = jax.random.normal(kx, (B, Cin, H, W), dtype=jnp.float32)
    # Deterministic synthetic weights (shapes follow nn.Conv2d OIHW, bias=False).
    w3 = 0.1 * jax.random.normal(k3, (num_residual_hiddens, Cin, 3, 3),
                                 dtype=jnp.float32)
    w1 = 0.1 * jax.random.normal(k1, (num_hiddens, num_residual_hiddens, 1, 1),
                                 dtype=jnp.float32)

    w3m, w1m = prepare_weights(w3, w1)      # one-time weight repack (hoisted)
    out = residual_forward(x, w3m, w1m)
    out = jax.block_until_ready(out)

    ref = _reference_forward(x, w3, w1)
    assert out.shape == (B, num_hiddens, H, W)
    assert jnp.allclose(out, ref, atol=1e-4, rtol=1e-4), "mismatch vs reference"

    print("KERNEL_OK")
</pallas_src>

<mosaic_0001>
module attributes {stable_mosaic.version = 11 : i64} {
  func.func @_residual_kernel(%arg0: i32, %arg1: memref<4x8x256xf32, #tpu.memory_space<vmem>>, %arg2: memref<16x72xf32, #tpu.memory_space<vmem>>, %arg3: memref<8x16xf32, #tpu.memory_space<vmem>>, %arg4: memref<9x256xf32, #tpu.memory_space<vmem>>, %arg5: memref<4x8x256xf32, #tpu.memory_space<vmem>>, %arg6: memref<72x256xf32, #tpu.memory_space<vmem>>) attributes {dimension_semantics = [#tpu.dimension_semantics<parallel>], iteration_bounds = array<i64: 2>, scalar_prefetch = 0 : i64, scratch_operands = 1 : i64, tpu.core_type = #tpu.core_type<tc>, window_params = [{transform_indices = @transform_0, window_bounds = array<i64: 4, 8, 256>}, {pipeline_mode = #tpu.pipeline_mode<synchronous>, transform_indices = @transform_1, window_bounds = array<i64: 16, 72>}, {pipeline_mode = #tpu.pipeline_mode<synchronous>, transform_indices = @transform_2, window_bounds = array<i64: 8, 16>}, {pipeline_mode = #tpu.pipeline_mode<synchronous>, transform_indices = @transform_3, window_bounds = array<i64: 9, 256>}, {transform_indices = @transform_4, window_bounds = array<i64: 4, 8, 256>}]} {
    %c0 = arith.constant 0 : index
    %c0_0 = arith.constant 0 : index
    %0 = vector.load %arg2[%c0, %c0_0] : memref<16x72xf32, #tpu.memory_space<vmem>>, vector<16x72xf32>
    %c0_1 = arith.constant 0 : index
    %c0_2 = arith.constant 0 : index
    %1 = vector.load %arg3[%c0_1, %c0_2] : memref<8x16xf32, #tpu.memory_space<vmem>>, vector<8x16xf32>
    %c0_3 = arith.constant 0 : index
    %c0_4 = arith.constant 0 : index
    %2 = vector.load %arg4[%c0_3, %c0_4] : memref<9x256xf32, #tpu.memory_space<vmem>>, vector<9x256xf32>
    %3 = vector.extract_strided_slice %2 {offsets = [0, 0], sizes = [1, 256], strides = [1, 1]} : vector<9x256xf32> to vector<1x256xf32>
    %4 = vector.shape_cast %3 : vector<1x256xf32> to vector<256xf32>
    %5 = vector.extract_strided_slice %2 {offsets = [1, 0], sizes = [1, 256], strides = [1, 1]} : vector<9x256xf32> to vector<1x256xf32>
    %6 = vector.shape_cast %5 : vector<1x256xf32> to vector<256xf32>
    %7 = vector.extract_strided_slice %2 {offsets = [2, 0], sizes = [1, 256], strides = [1, 1]} : vector<9x256xf32> to vector<1x256xf32>
    %8 = vector.shape_cast %7 : vector<1x256xf32> to vector<256xf32>
    %9 = vector.extract_strided_slice %2 {offsets = [3, 0], sizes = [1, 256], strides = [1, 1]} : vector<9x256xf32> to vector<1x256xf32>
    %10 = vector.shape_cast %9 : vector<1x256xf32> to vector<256xf32>
    %11 = vector.extract_strided_slice %2 {offsets = [5, 0], sizes = [1, 256], strides = [1, 1]} : vector<9x256xf32> to vector<1x256xf32>
    %12 = vector.shape_cast %11 : vector<1x256xf32> to vector<256xf32>
    %13 = vector.extract_strided_slice %2 {offsets = [6, 0], sizes = [1, 256], strides = [1, 1]} : vector<9x256xf32> to vector<1x256xf32>
    %14 = vector.shape_cast %13 : vector<1x256xf32> to vector<256xf32>
    %15 = vector.extract_strided_slice %2 {offsets = [7, 0], sizes = [1, 256], strides = [1, 1]} : vector<9x256xf32> to vector<1x256xf32>
    %16 = vector.shape_cast %15 : vector<1x256xf32> to vector<256xf32>
    %17 = vector.extract_strided_slice %2 {offsets = [8, 0], sizes = [1, 256], strides = [1, 1]} : vector<9x256xf32> to vector<1x256xf32>
    %18 = vector.shape_cast %17 : vector<1x256xf32> to vector<256xf32>
    %c0_5 = arith.constant 0 : index
    %c0_6 = arith.constant 0 : index
    %c0_7 = arith.constant 0 : index
    %19 = vector.load %arg1[%c0_5, %c0_6, %c0_7] : memref<4x8x256xf32, #tpu.memory_space<vmem>>, vector<1x8x256xf32>
    %20 = vector.shape_cast %19 : vector<1x8x256xf32> to vector<8x256xf32>
    %cst = arith.constant 0.000000e+00 : f32
    %21 = vector.broadcast %cst : f32 to vector<8x256xf32>
    %22 = arith.maximumf %20, %21 : vector<8x256xf32>
    %c17_i32 = arith.constant 17 : i32
    %23 = tpu.dynamic_rotate %22 by %c17_i32 dim 1 : vector<8x256xf32>, i32 -> vector<8x256xf32>
    %24 = vector.shape_cast %4 : vector<256xf32> to vector<1x256xf32>
    %25 = vector.broadcast %24 : vector<1x256xf32> to vector<8x256xf32>
    %26 = arith.mulf %23, %25 : vector<8x256xf32>
    %c0_8 = arith.constant 0 : index
    %c0_9 = arith.constant 0 : index
    %27 = vector.load %arg6[%c0_8, %c0_9] : memref<72x256xf32, #tpu.memory_space<vmem>>, vector<8x256xf32>
    tpu.vector_store %arg6[%c0_8, %c0_9], %26 {strides = array<i32>} : memref<72x256xf32, #tpu.memory_space<vmem>>, vector<8x256xf32>,
    %c16_i32 = arith.constant 16 : i32
    %28 = tpu.dynamic_rotate %22 by %c16_i32 dim 1 : vector<8x256xf32>, i32 -> vector<8x256xf32>
    %29 = vector.shape_cast %6 : vector<256xf32> to vector<1x256xf32>
    %30 = vector.broadcast %29 : vector<1x256xf32> to vector<8x256xf32>
    %31 = arith.mulf %28, %30 : vector<8x256xf32>
    %c8 = arith.constant 8 : index
    %c0_10 = arith.constant 0 : index
    %32 = vector.load %arg6[%c8, %c0_10] : memref<72x256xf32, #tpu.memory_space<vmem>>, vector<8x256xf32>
    tpu.vector_store %arg6[%c8, %c0_10], %31 {strides = array<i32>} : memref<72x256xf32, #tpu.memory_space<vmem>>, vector<8x256xf32>,
    %c15_i32 = arith.constant 15 : i32
    %33 = tpu.dynamic_rotate %22 by %c15_i32 dim 1 : vector<8x256xf32>, i32 -> vector<8x256xf32>
    %34 = vector.shape_cast %8 : vector<256xf32> to vector<1x256xf32>
    %35 = vector.broadcast %34 : vector<1x256xf32> to vector<8x256xf32>
    %36 = arith.mulf %33, %35 : vector<8x256xf32>
    %c16 = arith.constant 16 : index
    %c0_11 = arith.constant 0 : index
    %37 = vector.load %arg6[%c16, %c0_11] : memref<72x256xf32, #tpu.memory_space<vmem>>, vector<8x256xf32>
    tpu.vector_store %arg6[%c16, %c0_11], %36 {strides = array<i32>} : memref<72x256xf32, #tpu.memory_space<vmem>>, vector<8x256xf32>,
    %c1_i32 = arith.constant 1 : i32
    %38 = tpu.dynamic_rotate %22 by %c1_i32 dim 1 : vector<8x256xf32>, i32 -> vector<8x256xf32>
    %39 = vector.shape_cast %10 : vector<256xf32> to vector<1x256xf32>
    %40 = vector.broadcast %39 : vector<1x256xf32> to vector<8x256xf32>
    %41 = arith.mulf %38, %40 : vector<8x256xf32>
    %c24 = arith.constant 24 : index
    %c0_12 = arith.constant 0 : index
    %42 = vector.load %arg6[%c24, %c0_12] : memref<72x256xf32, #tpu.memory_space<vmem>>, vector<8x256xf32>
    tpu.vector_store %arg6[%c24, %c0_12], %41 {strides = array<i32>} : memref<72x256xf32, #tpu.memory_space<vmem>>, vector<8x256xf32>,
    %c32 = arith.constant 32 : index
    %c0_13 = arith.constant 0 : index
    %43 = vector.load %arg6[%c32, %c0_13] : memref<72x256xf32, #tpu.memory_space<vmem>>, vector<8x256xf32>
    tpu.vector_store %arg6[%c32, %c0_13], %22 {strides = array<i32>} : memref<72x256xf32, #tpu.memory_space<vmem>>, vector<8x256xf32>,
    %c255_i32 = arith.constant 255 : i32
    %44 = tpu.dynamic_rotate %22 by %c255_i32 dim 1 : vector<8x256xf32>, i32 -> vector<8x256xf32>
    %45 = vector.shape_cast %12 : vector<256xf32> to vector<1x256xf32>
    %46 = vector.broadcast %45 : vector<1x256xf32> to vector<8x256xf32>
    %47 = arith.mulf %44, %46 : vector<8x256xf32>
    %c40 = arith.constant 40 : index
    %c0_14 = arith.constant 0 : index
    %48 = vector.load %arg6[%c40, %c0_14] : memref<72x256xf32, #tpu.memory_space<vmem>>, vector<8x256xf32>
    tpu.vector_store %arg6[%c40, %c0_14], %47 {strides = array<i32>} : memref<72x256xf32, #tpu.memory_space<vmem>>, vector<8x256xf32>,
    %c241_i32 = arith.constant 241 : i32
    %49 = tpu.dynamic_rotate %22 by %c241_i32 dim 1 : vector<8x256xf32>, i32 -> vector<8x256xf32>
    %50 = vector.shape_cast %14 : vector<256xf32> to vector<1x256xf32>
    %51 = vector.broadcast %50 : vector<1x256xf32> to vector<8x256xf32>
    %52 = arith.mulf %49, %51 : vector<8x256xf32>
    %c48 = arith.constant 48 : index
    %c0_15 = arith.constant 0 : index
    %53 = vector.load %arg6[%c48, %c0_15] : memref<72x256xf32, #tpu.memory_space<vmem>>, vector<8x256xf32>
    tpu.vector_store %arg6[%c48, %c0_15], %52 {strides = array<i32>} : memref<72x256xf32, #tpu.memory_space<vmem>>, vector<8x256xf32>,
    %c240_i32 = arith.constant 240 : i32
    %54 = tpu.dynamic_rotate %22 by %c240_i32 dim 1 : vector<8x256xf32>, i32 -> vector<8x256xf32>
    %55 = vector.shape_cast %16 : vector<256xf32> to vector<1x256xf32>
    %56 = vector.broadcast %55 : vector<1x256xf32> to vector<8x256xf32>
    %57 = arith.mulf %54, %56 : vector<8x256xf32>
    %c56 = arith.constant 56 : index
    %c0_16 = arith.constant 0 : index
    %58 = vector.load %arg6[%c56, %c0_16] : memref<72x256xf32, #tpu.memory_space<vmem>>, vector<8x256xf32>
    tpu.vector_store %arg6[%c56, %c0_16], %57 {strides = array<i32>} : memref<72x256xf32, #tpu.memory_space<vmem>>, vector<8x256xf32>,
    %c239_i32 = arith.constant 239 : i32
    %59 = tpu.dynamic_rotate %22 by %c239_i32 dim 1 : vector<8x256xf32>, i32 -> vector<8x256xf32>
    %60 = vector.shape_cast %18 : vector<256xf32> to vector<1x256xf32>
    %61 = vector.broadcast %60 : vector<1x256xf32> to vector<8x256xf32>
    %62 = arith.mulf %59, %61 : vector<8x256xf32>
    %c64 = arith.constant 64 : index
    %c0_17 = arith.constant 0 : index
    %63 = vector.load %arg6[%c64, %c0_17] : memref<72x256xf32, #tpu.memory_space<vmem>>, vector<8x256xf32>
    tpu.vector_store %arg6[%c64, %c0_17], %62 {strides = array<i32>} : memref<72x256xf32, #tpu.memory_space<vmem>>, vector<8x256xf32>,
    %c0_18 = arith.constant 0 : index
    %c0_19 = arith.constant 0 : index
    %64 = vector.load %arg6[%c0_18, %c0_19] : memref<72x256xf32, #tpu.memory_space<vmem>>, vector<72x256xf32>
    %cst_20 = arith.constant dense<0.000000e+00> : vector<16x256xf32>
    %65 = tpu.matmul %0, %64, %cst_20 {dimension_numbers = #tpu.dot_dimension_numbers<[1], [0], [0], [1], [0, 0, 1, 1], [], []>} : vector<16x72xf32>, vector<72x256xf32>, vector<16x256xf32> -> vector<16x256xf32>
    %cst_21 = arith.constant 0.000000e+00 : f32
    %66 = vector.broadcast %cst_21 : f32 to vector<16x256xf32>
    %67 = arith.maximumf %65, %66 : vector<16x256xf32>
    %cst_22 = arith.constant dense<0.000000e+00> : vector<8x256xf32>
    %68 = tpu.matmul %1, %67, %cst_22 {dimension_numbers = #tpu.dot_dimension_numbers<[1], [0], [0], [1], [0, 0, 1, 1], [], []>} : vector<8x16xf32>, vector<16x256xf32>, vector<8x256xf32> -> vector<8x256xf32>
    %69 = arith.addf %20, %68 : vector<8x256xf32>
    %c0_23 = arith.constant 0 : index
    %c0_24 = arith.constant 0 : index
    %c0_25 = arith.constant 0 : index
    %70 = vector.load %arg5[%c0_23, %c0_24, %c0_25] : memref<4x8x256xf32, #tpu.memory_space<vmem>>, vector<1x8x256xf32>
    %71 = vector.shape_cast %70 : vector<1x8x256xf32> to vector<8x256xf32>
    %72 = vector.shape_cast %69 : vector<8x256xf32> to vector<1x8x256xf32>
    tpu.vector_store %arg5[%c0_23, %c0_24, %c0_25], %72 {strides = array<i32>} : memref<4x8x256xf32, #tpu.memory_space<vmem>>, vector<1x8x256xf32>,
    %c1 = arith.constant 1 : index
    %c0_26 = arith.constant 0 : index
    %c0_27 = arith.constant 0 : index
    %73 = vector.load %arg1[%c1, %c0_26, %c0_27] : memref<4x8x256xf32, #tpu.memory_space<vmem>>, vector<1x8x256xf32>
    %74 = vector.shape_cast %73 : vector<1x8x256xf32> to vector<8x256xf32>
    %cst_28 = arith.constant 0.000000e+00 : f32
    %75 = vector.broadcast %cst_28 : f32 to vector<8x256xf32>
    %76 = arith.maximumf %74, %75 : vector<8x256xf32>
    %c17_i32_29 = arith.constant 17 : i32
    %77 = tpu.dynamic_rotate %76 by %c17_i32_29 dim 1 : vector<8x256xf32>, i32 -> vector<8x256xf32>
    %78 = vector.shape_cast %4 : vector<256xf32> to vector<1x256xf32>
    %79 = vector.broadcast %78 : vector<1x256xf32> to vector<8x256xf32>
    %80 = arith.mulf %77, %79 : vector<8x256xf32>
    %c0_30 = arith.constant 0 : index
    %c0_31 = arith.constant 0 : index
    %81 = vector.load %arg6[%c0_30, %c0_31] : memref<72x256xf32, #tpu.memory_space<vmem>>, vector<8x256xf32>
    tpu.vector_store %arg6[%c0_30, %c0_31], %80 {strides = array<i32>} : memref<72x256xf32, #tpu.memory_space<vmem>>, vector<8x256xf32>,
    %c16_i32_32 = arith.constant 16 : i32
    %82 = tpu.dynamic_rotate %76 by %c16_i32_32 dim 1 : vector<8x256xf32>, i32 -> vector<8x256xf32>
    %83 = vector.shape_cast %6 : vector<256xf32> to vector<1x256xf32>
    %84 = vector.broadcast %83 : vector<1x256xf32> to vector<8x256xf32>
    %85 = arith.mulf %82, %84 : vector<8x256xf32>
    %c8_33 = arith.constant 8 : index
    %c0_34 = arith.constant 0 : index
    %86 = vector.load %arg6[%c8_33, %c0_34] : memref<72x256xf32, #tpu.memory_space<vmem>>, vector<8x256xf32>
    tpu.vector_store %arg6[%c8_33, %c0_34], %85 {strides = array<i32>} : memref<72x256xf32, #tpu.memory_space<vmem>>, vector<8x256xf32>,
    %c15_i32_35 = arith.constant 15 : i32
    %87 = tpu.dynamic_rotate %76 by %c15_i32_35 dim 1 : vector<8x256xf32>, i32 -> vector<8x256xf32>
    %88 = vector.shape_cast %8 : vector<256xf32> to vector<1x256xf32>
    %89 = vector.broadcast %88 : vector<1x256xf32> to vector<8x256xf32>
    %90 = arith.mulf %87, %89 : vector<8x256xf32>
    %c16_36 = arith.constant 16 : index
    %c0_37 = arith.constant 0 : index
    %91 = vector.load %arg6[%c16_36, %c0_37] : memref<72x256xf32, #tpu.memory_space<vmem>>, vector<8x256xf32>
    tpu.vector_store %arg6[%c16_36, %c0_37], %90 {strides = array<i32>} : memref<72x256xf32, #tpu.memory_space<vmem>>, vector<8x256xf32>,
    %c1_i32_38 = arith.constant 1 : i32
    %92 = tpu.dynamic_rotate %76 by %c1_i32_38 dim 1 : vector<8x256xf32>, i32 -> vector<8x256xf32>
    %93 = vector.shape_cast %10 : vector<256xf32> to vector<1x256xf32>
    %94 = vector.broadcast %93 : vector<1x256xf32> to vector<8x256xf32>
    %95 = arith.mulf %92, %94 : vector<8x256xf32>
    %c24_39 = arith.constant 24 : index
    %c0_40 = arith.constant 0 : index
    %96 = vector.load %arg6[%c24_39, %c0_40] : memref<72x256xf32, #tpu.memory_space<vmem>>, vector<8x256xf32>
    tpu.vector_store %arg6[%c24_39, %c0_40], %95 {strides = array<i32>} : memref<72x256xf32, #tpu.memory_space<vmem>>, vector<8x256xf32>,
    %c32_41 = arith.constant 32 : index
    %c0_42 = arith.constant 0 : index
    %97 = vector.load %arg6[%c32_41, %c0_42] : memref<72x256xf32, #tpu.memory_space<vmem>>, vector<8x256xf32>
    tpu.vector_store %arg6[%c32_41, %c0_42], %76 {strides = array<i32>} : memref<72x256xf32, #tpu.memory_space<vmem>>, vector<8x256xf32>,
    %c255_i32_43 = arith.constant 255 : i32
    %98 = tpu.dynamic_rotate %76 by %c255_i32_43 dim 1 : vector<8x256xf32>, i32 -> vector<8x256xf32>
    %99 = vector.shape_cast %12 : vector<256xf32> to vector<1x256xf32>
    %100 = vector.broadcast %99 : vector<1x256xf32> to vector<8x256xf32>
    %101 = arith.mulf %98, %100 : vector<8x256xf32>
    %c40_44 = arith.constant 40 : index
    %c0_45 = arith.constant 0 : index
    %102 = vector.load %arg6[%c40_44, %c0_45] : memref<72x256xf32, #tpu.memory_space<vmem>>, vector<8x256xf32>
    tpu.vector_store %arg6[%c40_44, %c0_45], %101 {strides = array<i32>} : memref<72x256xf32, #tpu.memory_space<vmem>>, vector<8x256xf32>,
    %c241_i32_46 = arith.constant 241 : i32
    %103 = tpu.dynamic_rotate %76 by %c241_i32_46 dim 1 : vector<8x256xf32>, i32 -> vector<8x256xf32>
    %104 = vector.shape_cast %14 : vector<256xf32> to vector<1x256xf32>
    %105 = vector.broadcast %104 : vector<1x256xf32> to vector<8x256xf32>
    %106 = arith.mulf %103, %105 : vector<8x256xf32>
    %c48_47 = arith.constant 48 : index
    %c0_48 = arith.constant 0 : index
    %107 = vector.load %arg6[%c48_47, %c0_48] : memref<72x256xf32, #tpu.memory_space<vmem>>, vector<8x256xf32>
    tpu.vector_store %arg6[%c48_47, %c0_48], %106 {strides = array<i32>} : memref<72x256xf32, #tpu.memory_space<vmem>>, vector<8x256xf32>,
    %c240_i32_49 = arith.constant 240 : i32
    %108 = tpu.dynamic_rotate %76 by %c240_i32_49 dim 1 : vector<8x256xf32>, i32 -> vector<8x256xf32>
    %109 = vector.shape_cast %16 : vector<256xf32> to vector<1x256xf32>
    %110 = vector.broadcast %109 : vector<1x256xf32> to vector<8x256xf32>
    %111 = arith.mulf %108, %110 : vector<8x256xf32>
    %c56_50 = arith.constant 56 : index
    %c0_51 = arith.constant 0 : index
    %112 = vector.load %arg6[%c56_50, %c0_51] : memref<72x256xf32, #tpu.memory_space<vmem>>, vector<8x256xf32>
    tpu.vector_store %arg6[%c56_50, %c0_51], %111 {strides = array<i32>} : memref<72x256xf32, #tpu.memory_space<vmem>>, vector<8x256xf32>,
    %c239_i32_52 = arith.constant 239 : i32
    %113 = tpu.dynamic_rotate %76 by %c239_i32_52 dim 1 : vector<8x256xf32>, i32 -> vector<8x256xf32>
    %114 = vector.shape_cast %18 : vector<256xf32> to vector<1x256xf32>
    %115 = vector.broadcast %114 : vector<1x256xf32> to vector<8x256xf32>
    %116 = arith.mulf %113, %115 : vector<8x256xf32>
    %c64_53 = arith.constant 64 : index
    %c0_54 = arith.constant 0 : index
    %117 = vector.load %arg6[%c64_53, %c0_54] : memref<72x256xf32, #tpu.memory_space<vmem>>, vector<8x256xf32>
    tpu.vector_store %arg6[%c64_53, %c0_54], %116 {strides = array<i32>} : memref<72x256xf32, #tpu.memory_space<vmem>>, vector<8x256xf32>,
    %c0_55 = arith.constant 0 : index
    %c0_56 = arith.constant 0 : index
    %118 = vector.load %arg6[%c0_55, %c0_56] : memref<72x256xf32, #tpu.memory_space<vmem>>, vector<72x256xf32>
    %cst_57 = arith.constant dense<0.000000e+00> : vector<16x256xf32>
    %119 = tpu.matmul %0, %118, %cst_57 {dimension_numbers = #tpu.dot_dimension_numbers<[1], [0], [0], [1], [0, 0, 1, 1], [], []>} : vector<16x72xf32>, vector<72x256xf32>, vector<16x256xf32> -> vector<16x256xf32>
    %cst_58 = arith.constant 0.000000e+00 : f32
    %120 = vector.broadcast %cst_58 : f32 to vector<16x256xf32>
    %121 = arith.maximumf %119, %120 : vector<16x256xf32>
    %cst_59 = arith.constant dense<0.000000e+00> : vector<8x256xf32>
    %122 = tpu.matmul %1, %121, %cst_59 {dimension_numbers = #tpu.dot_dimension_numbers<[1], [0], [0], [1], [0, 0, 1, 1], [], []>} : vector<8x16xf32>, vector<16x256xf32>, vector<8x256xf32> -> vector<8x256xf32>
    %123 = arith.addf %74, %122 : vector<8x256xf32>
    %c1_60 = arith.constant 1 : index
    %c0_61 = arith.constant 0 : index
    %c0_62 = arith.constant 0 : index
    %124 = vector.load %arg5[%c1_60, %c0_61, %c0_62] : memref<4x8x256xf32, #tpu.memory_space<vmem>>, vector<1x8x256xf32>
    %125 = vector.shape_cast %124 : vector<1x8x256xf32> to vector<8x256xf32>
    %126 = vector.shape_cast %123 : vector<8x256xf32> to vector<1x8x256xf32>
    tpu.vector_store %arg5[%c1_60, %c0_61, %c0_62], %126 {strides = array<i32>} : memref<4x8x256xf32, #tpu.memory_space<vmem>>, vector<1x8x256xf32>,
    %c2 = arith.constant 2 : index
    %c0_63 = arith.constant 0 : index
    %c0_64 = arith.constant 0 : index
    %127 = vector.load %arg1[%c2, %c0_63, %c0_64] : memref<4x8x256xf32, #tpu.memory_space<vmem>>, vector<1x8x256xf32>
    %128 = vector.shape_cast %127 : vector<1x8x256xf32> to vector<8x256xf32>
    %cst_65 = arith.constant 0.000000e+00 : f32
    %129 = vector.broadcast %cst_65 : f32 to vector<8x256xf32>
    %130 = arith.maximumf %128, %129 : vector<8x256xf32>
    %c17_i32_66 = arith.constant 17 : i32
    %131 = tpu.dynamic_rotate %130 by %c17_i32_66 dim 1 : vector<8x256xf32>, i32 -> vector<8x256xf32>
    %132 = vector.shape_cast %4 : vector<256xf32> to vector<1x256xf32>
    %133 = vector.broadcast %132 : vector<1x256xf32> to vector<8x256xf32>
    %134 = arith.mulf %131, %133 : vector<8x256xf32>
    %c0_67 = arith.constant 0 : index
    %c0_68 = arith.constant 0 : index
    %135 = vector.load %arg6[%c0_67, %c0_68] : memref<72x256xf32, #tpu.memory_space<vmem>>, vector<8x256xf32>
    tpu.vector_store %arg6[%c0_67, %c0_68], %134 {strides = array<i32>} : memref<72x256xf32, #tpu.memory_space<vmem>>, vector<8x256xf32>,
    %c16_i32_69 = arith.constant 16 : i32
    %136 = tpu.dynamic_rotate %130 by %c16_i32_69 dim 1 : vector<8x256xf32>, i32 -> vector<8x256xf32>
    %137 = vector.shape_cast %6 : vector<256xf32> to vector<1x256xf32>
    %138 = vector.broadcast %137 : vector<1x256xf32> to vector<8x256xf32>
    %139 = arith.mulf %136, %138 : vector<8x256xf32>
    %c8_70 = arith.constant 8 : index
    %c0_71 = arith.constant 0 : index
    %140 = vector.load %arg6[%c8_70, %c0_71] : memref<72x256xf32, #tpu.memory_space<vmem>>, vector<8x256xf32>
    tpu.vector_store %arg6[%c8_70, %c0_71], %139 {strides = array<i32>} : memref<72x256xf32, #tpu.memory_space<vmem>>, vector<8x256xf32>,
    %c15_i32_72 = arith.constant 15 : i32
    %141 = tpu.dynamic_rotate %130 by %c15_i32_72 dim 1 : vector<8x256xf32>, i32 -> vector<8x256xf32>
    %142 = vector.shape_cast %8 : vector<256xf32> to vector<1x256xf32>
    %143 = vector.broadcast %142 : vector<1x256xf32> to vector<8x256xf32>
    %144 = arith.mulf %141, %143 : vector<8x256xf32>
    %c16_73 = arith.constant 16 : index
    %c0_74 = arith.constant 0 : index
    %145 = vector.load %arg6[%c16_73, %c0_74] : memref<72x256xf32, #tpu.memory_space<vmem>>, vector<8x256xf32>
    tpu.vector_store %arg6[%c16_73, %c0_74], %144 {strides = array<i32>} : memref<72x256xf32, #tpu.memory_space<vmem>>, vector<8x256xf32>,
    %c1_i32_75 = arith.constant 1 : i32
    %146 = tpu.dynamic_rotate %130 by %c1_i32_75 dim 1 : vector<8x256xf32>, i32 -> vector<8x256xf32>
    %147 = vector.shape_cast %10 : vector<256xf32> to vector<1x256xf32>
    %148 = vector.broadcast %147 : vector<1x256xf32> to vector<8x256xf32>
    %149 = arith.mulf %146, %148 : vector<8x256xf32>
    %c24_76 = arith.constant 24 : index
    %c0_77 = arith.constant 0 : index
    %150 = vector.load %arg6[%c24_76, %c0_77] : memref<72x256xf32, #tpu.memory_space<vmem>>, vector<8x256xf32>
    tpu.vector_store %arg6[%c24_76, %c0_77], %149 {strides = array<i32>} : memref<72x256xf32, #tpu.memory_space<vmem>>, vector<8x256xf32>,
    %c32_78 = arith.constant 32 : index
    %c0_79 = arith.constant 0 : index
    %151 = vector.load %arg6[%c32_78, %c0_79] : memref<72x256xf32, #tpu.memory_space<vmem>>, vector<8x256xf32>
    tpu.vector_store %arg6[%c32_78, %c0_79], %130 {strides = array<i32>} : memref<72x256xf32, #tpu.memory_space<vmem>>, vector<8x256xf32>,
    %c255_i32_80 = arith.constant 255 : i32
    %152 = tpu.dynamic_rotate %130 by %c255_i32_80 dim 1 : vector<8x256xf32>, i32 -> vector<8x256xf32>
    %153 = vector.shape_cast %12 : vector<256xf32> to vector<1x256xf32>
    %154 = vector.broadcast %153 : vector<1x256xf32> to vector<8x256xf32>
    %155 = arith.mulf %152, %154 : vector<8x256xf32>
    %c40_81 = arith.constant 40 : index
    %c0_82 = arith.constant 0 : index
    %156 = vector.load %arg6[%c40_81, %c0_82] : memref<72x256xf32, #tpu.memory_space<vmem>>, vector<8x256xf32>
    tpu.vector_store %arg6[%c40_81, %c0_82], %155 {strides = array<i32>} : memref<72x256xf32, #tpu.memory_space<vmem>>, vector<8x256xf32>,
    %c241_i32_83 = arith.constant 241 : i32
    %157 = tpu.dynamic_rotate %130 by %c241_i32_83 dim 1 : vector<8x256xf32>, i32 -> vector<8x256xf32>
    %158 = vector.shape_cast %14 : vector<256xf32> to vector<1x256xf32>
    %159 = vector.broadcast %158 : vector<1x256xf32> to vector<8x256xf32>
    %160 = arith.mulf %157, %159 : vector<8x256xf32>
    %c48_84 = arith.constant 48 : index
    %c0_85 = arith.constant 0 : index
    %161 = vector.load %arg6[%c48_84, %c0_85] : memref<72x256xf32, #tpu.memory_space<vmem>>, vector<8x256xf32>
    tpu.vector_store %arg6[%c48_84, %c0_85], %160 {strides = array<i32>} : memref<72x256xf32, #tpu.memory_space<vmem>>, vector<8x256xf32>,
    %c240_i32_86 = arith.constant 240 : i32
    %162 = tpu.dynamic_rotate %130 by %c240_i32_86 dim 1 : vector<8x256xf32>, i32 -> vector<8x256xf32>
    %163 = vector.shape_cast %16 : vector<256xf32> to vector<1x256xf32>
    %164 = vector.broadcast %163 : vector<1x256xf32> to vector<8x256xf32>
    %165 = arith.mulf %162, %164 : vector<8x256xf32>
    %c56_87 = arith.constant 56 : index
    %c0_88 = arith.constant 0 : index
    %166 = vector.load %arg6[%c56_87, %c0_88] : memref<72x256xf32, #tpu.memory_space<vmem>>, vector<8x256xf32>
    tpu.vector_store %arg6[%c56_87, %c0_88], %165 {strides = array<i32>} : memref<72x256xf32, #tpu.memory_space<vmem>>, vector<8x256xf32>,
    %c239_i32_89 = arith.constant 239 : i32
    %167 = tpu.dynamic_rotate %130 by %c239_i32_89 dim 1 : vector<8x256xf32>, i32 -> vector<8x256xf32>
    %168 = vector.shape_cast %18 : vector<256xf32> to vector<1x256xf32>
    %169 = vector.broadcast %168 : vector<1x256xf32> to vector<8x256xf32>
    %170 = arith.mulf %167, %169 : vector<8x256xf32>
    %c64_90 = arith.constant 64 : index
    %c0_91 = arith.constant 0 : index
    %171 = vector.load %arg6[%c64_90, %c0_91] : memref<72x256xf32, #tpu.memory_space<vmem>>, vector<8x256xf32>
    tpu.vector_store %arg6[%c64_90, %c0_91], %170 {strides = array<i32>} : memref<72x256xf32, #tpu.memory_space<vmem>>, vector<8x256xf32>,
    %c0_92 = arith.constant 0 : index
    %c0_93 = arith.constant 0 : index
    %172 = vector.load %arg6[%c0_92, %c0_93] : memref<72x256xf32, #tpu.memory_space<vmem>>, vector<72x256xf32>
    %cst_94 = arith.constant dense<0.000000e+00> : vector<16x256xf32>
    %173 = tpu.matmul %0, %172, %cst_94 {dimension_numbers = #tpu.dot_dimension_numbers<[1], [0], [0], [1], [0, 0, 1, 1], [], []>} : vector<16x72xf32>, vector<72x256xf32>, vector<16x256xf32> -> vector<16x256xf32>
    %cst_95 = arith.constant 0.000000e+00 : f32
    %174 = vector.broadcast %cst_95 : f32 to vector<16x256xf32>
    %175 = arith.maximumf %173, %174 : vector<16x256xf32>
    %cst_96 = arith.constant dense<0.000000e+00> : vector<8x256xf32>
    %176 = tpu.matmul %1, %175, %cst_96 {dimension_numbers = #tpu.dot_dimension_numbers<[1], [0], [0], [1], [0, 0, 1, 1], [], []>} : vector<8x16xf32>, vector<16x256xf32>, vector<8x256xf32> -> vector<8x256xf32>
    %177 = arith.addf %128, %176 : vector<8x256xf32>
    %c2_97 = arith.constant 2 : index
    %c0_98 = arith.constant 0 : index
    %c0_99 = arith.constant 0 : index
    %178 = vector.load %arg5[%c2_97, %c0_98, %c0_99] : memref<4x8x256xf32, #tpu.memory_space<vmem>>, vector<1x8x256xf32>
    %179 = vector.shape_cast %178 : vector<1x8x256xf32> to vector<8x256xf32>
    %180 = vector.shape_cast %177 : vector<8x256xf32> to vector<1x8x256xf32>
    tpu.vector_store %arg5[%c2_97, %c0_98, %c0_99], %180 {strides = array<i32>} : memref<4x8x256xf32, #tpu.memory_space<vmem>>, vector<1x8x256xf32>,
    %c3 = arith.constant 3 : index
    %c0_100 = arith.constant 0 : index
    %c0_101 = arith.constant 0 : index
    %181 = vector.load %arg1[%c3, %c0_100, %c0_101] : memref<4x8x256xf32, #tpu.memory_space<vmem>>, vector<1x8x256xf32>
    %182 = vector.shape_cast %181 : vector<1x8x256xf32> to vector<8x256xf32>
    %cst_102 = arith.constant 0.000000e+00 : f32
    %183 = vector.broadcast %cst_102 : f32 to vector<8x256xf32>
    %184 = arith.maximumf %182, %183 : vector<8x256xf32>
    %c17_i32_103 = arith.constant 17 : i32
    %185 = tpu.dynamic_rotate %184 by %c17_i32_103 dim 1 : vector<8x256xf32>, i32 -> vector<8x256xf32>
    %186 = vector.shape_cast %4 : vector<256xf32> to vector<1x256xf32>
    %187 = vector.broadcast %186 : vector<1x256xf32> to vector<8x256xf32>
    %188 = arith.mulf %185, %187 : vector<8x256xf32>
    %c0_104 = arith.constant 0 : index
    %c0_105 = arith.constant 0 : index
    %189 = vector.load %arg6[%c0_104, %c0_105] : memref<72x256xf32, #tpu.memory_space<vmem>>, vector<8x256xf32>
    tpu.vector_store %arg6[%c0_104, %c0_105], %188 {strides = array<i32>} : memref<72x256xf32, #tpu.memory_space<vmem>>, vector<8x256xf32>,
    %c16_i32_106 = arith.constant 16 : i32
    %190 = tpu.dynamic_rotate %184 by %c16_i32_106 dim 1 : vector<8x256xf32>, i32 -> vector<8x256xf32>
    %191 = vector.shape_cast %6 : vector<256xf32> to vector<1x256xf32>
    %192 = vector.broadcast %191 : vector<1x256xf32> to vector<8x256xf32>
    %193 = arith.mulf %190, %192 : vector<8x256xf32>
    %c8_107 = arith.constant 8 : index
    %c0_108 = arith.constant 0 : index
    %194 = vector.load %arg6[%c8_107, %c0_108] : memref<72x256xf32, #tpu.memory_space<vmem>>, vector<8x256xf32>
    tpu.vector_store %arg6[%c8_107, %c0_108], %193 {strides = array<i32>} : memref<72x256xf32, #tpu.memory_space<vmem>>, vector<8x256xf32>,
    %c15_i32_109 = arith.constant 15 : i32
    %195 = tpu.dynamic_rotate %184 by %c15_i32_109 dim 1 : vector<8x256xf32>, i32 -> vector<8x256xf32>
    %196 = vector.shape_cast %8 : vector<256xf32> to vector<1x256xf32>
    %197 = vector.broadcast %196 : vector<1x256xf32> to vector<8x256xf32>
    %198 = arith.mulf %195, %197 : vector<8x256xf32>
    %c16_110 = arith.constant 16 : index
    %c0_111 = arith.constant 0 : index
    %199 = vector.load %arg6[%c16_110, %c0_111] : memref<72x256xf32, #tpu.memory_space<vmem>>, vector<8x256xf32>
    tpu.vector_store %arg6[%c16_110, %c0_111], %198 {strides = array<i32>} : memref<72x256xf32, #tpu.memory_space<vmem>>, vector<8x256xf32>,
    %c1_i32_112 = arith.constant 1 : i32
    %200 = tpu.dynamic_rotate %184 by %c1_i32_112 dim 1 : vector<8x256xf32>, i32 -> vector<8x256xf32>
    %201 = vector.shape_cast %10 : vector<256xf32> to vector<1x256xf32>
    %202 = vector.broadcast %201 : vector<1x256xf32> to vector<8x256xf32>
    %203 = arith.mulf %200, %202 : vector<8x256xf32>
    %c24_113 = arith.constant 24 : index
    %c0_114 = arith.constant 0 : index
    %204 = vector.load %arg6[%c24_113, %c0_114] : memref<72x256xf32, #tpu.memory_space<vmem>>, vector<8x256xf32>
    tpu.vector_store %arg6[%c24_113, %c0_114], %203 {strides = array<i32>} : memref<72x256xf32, #tpu.memory_space<vmem>>, vector<8x256xf32>,
    %c32_115 = arith.constant 32 : index
    %c0_116 = arith.constant 0 : index
    %205 = vector.load %arg6[%c32_115, %c0_116] : memref<72x256xf32, #tpu.memory_space<vmem>>, vector<8x256xf32>
    tpu.vector_store %arg6[%c32_115, %c0_116], %184 {strides = array<i32>} : memref<72x256xf32, #tpu.memory_space<vmem>>, vector<8x256xf32>,
    %c255_i32_117 = arith.constant 255 : i32
    %206 = tpu.dynamic_rotate %184 by %c255_i32_117 dim 1 : vector<8x256xf32>, i32 -> vector<8x256xf32>
    %207 = vector.shape_cast %12 : vector<256xf32> to vector<1x256xf32>
    %208 = vector.broadcast %207 : vector<1x256xf32> to vector<8x256xf32>
    %209 = arith.mulf %206, %208 : vector<8x256xf32>
    %c40_118 = arith.constant 40 : index
    %c0_119 = arith.constant 0 : index
    %210 = vector.load %arg6[%c40_118, %c0_119] : memref<72x256xf32, #tpu.memory_space<vmem>>, vector<8x256xf32>
    tpu.vector_store %arg6[%c40_118, %c0_119], %209 {strides = array<i32>} : memref<72x256xf32, #tpu.memory_space<vmem>>, vector<8x256xf32>,
    %c241_i32_120 = arith.constant 241 : i32
    %211 = tpu.dynamic_rotate %184 by %c241_i32_120 dim 1 : vector<8x256xf32>, i32 -> vector<8x256xf32>
    %212 = vector.shape_cast %14 : vector<256xf32> to vector<1x256xf32>
    %213 = vector.broadcast %212 : vector<1x256xf32> to vector<8x256xf32>
    %214 = arith.mulf %211, %213 : vector<8x256xf32>
    %c48_121 = arith.constant 48 : index
    %c0_122 = arith.constant 0 : index
    %215 = vector.load %arg6[%c48_121, %c0_122] : memref<72x256xf32, #tpu.memory_space<vmem>>, vector<8x256xf32>
    tpu.vector_store %arg6[%c48_121, %c0_122], %214 {strides = array<i32>} : memref<72x256xf32, #tpu.memory_space<vmem>>, vector<8x256xf32>,
    %c240_i32_123 = arith.constant 240 : i32
    %216 = tpu.dynamic_rotate %184 by %c240_i32_123 dim 1 : vector<8x256xf32>, i32 -> vector<8x256xf32>
    %217 = vector.shape_cast %16 : vector<256xf32> to vector<1x256xf32>
    %218 = vector.broadcast %217 : vector<1x256xf32> to vector<8x256xf32>
    %219 = arith.mulf %216, %218 : vector<8x256xf32>
    %c56_124 = arith.constant 56 : index
    %c0_125 = arith.constant 0 : index
    %220 = vector.load %arg6[%c56_124, %c0_125] : memref<72x256xf32, #tpu.memory_space<vmem>>, vector<8x256xf32>
    tpu.vector_store %arg6[%c56_124, %c0_125], %219 {strides = array<i32>} : memref<72x256xf32, #tpu.memory_space<vmem>>, vector<8x256xf32>,
    %c239_i32_126 = arith.constant 239 : i32
    %221 = tpu.dynamic_rotate %184 by %c239_i32_126 dim 1 : vector<8x256xf32>, i32 -> vector<8x256xf32>
    %222 = vector.shape_cast %18 : vector<256xf32> to vector<1x256xf32>
    %223 = vector.broadcast %222 : vector<1x256xf32> to vector<8x256xf32>
    %224 = arith.mulf %221, %223 : vector<8x256xf32>
    %c64_127 = arith.constant 64 : index
    %c0_128 = arith.constant 0 : index
    %225 = vector.load %arg6[%c64_127, %c0_128] : memref<72x256xf32, #tpu.memory_space<vmem>>, vector<8x256xf32>
    tpu.vector_store %arg6[%c64_127, %c0_128], %224 {strides = array<i32>} : memref<72x256xf32, #tpu.memory_space<vmem>>, vector<8x256xf32>,
    %c0_129 = arith.constant 0 : index
    %c0_130 = arith.constant 0 : index
    %226 = vector.load %arg6[%c0_129, %c0_130] : memref<72x256xf32, #tpu.memory_space<vmem>>, vector<72x256xf32>
    %cst_131 = arith.constant dense<0.000000e+00> : vector<16x256xf32>
    %227 = tpu.matmul %0, %226, %cst_131 {dimension_numbers = #tpu.dot_dimension_numbers<[1], [0], [0], [1], [0, 0, 1, 1], [], []>} : vector<16x72xf32>, vector<72x256xf32>, vector<16x256xf32> -> vector<16x256xf32>
    %cst_132 = arith.constant 0.000000e+00 : f32
    %228 = vector.broadcast %cst_132 : f32 to vector<16x256xf32>
    %229 = arith.maximumf %227, %228 : vector<16x256xf32>
    %cst_133 = arith.constant dense<0.000000e+00> : vector<8x256xf32>
    %230 = tpu.matmul %1, %229, %cst_133 {dimension_numbers = #tpu.dot_dimension_numbers<[1], [0], [0], [1], [0, 0, 1, 1], [], []>} : vector<8x16xf32>, vector<16x256xf32>, vector<8x256xf32> -> vector<8x256xf32>
    %231 = arith.addf %182, %230 : vector<8x256xf32>
    %c3_134 = arith.constant 3 : index
    %c0_135 = arith.constant 0 : index
    %c0_136 = arith.constant 0 : index
    %232 = vector.load %arg5[%c3_134, %c0_135, %c0_136] : memref<4x8x256xf32, #tpu.memory_space<vmem>>, vector<1x8x256xf32>
    %233 = vector.shape_cast %232 : vector<1x8x256xf32> to vector<8x256xf32>
    %234 = vector.shape_cast %231 : vector<8x256xf32> to vector<1x8x256xf32>
    tpu.vector_store %arg5[%c3_134, %c0_135, %c0_136], %234 {strides = array<i32>} : memref<4x8x256xf32, #tpu.memory_space<vmem>>, vector<1x8x256xf32>,
    return
  }
  func.func @transform_0(%arg0: i32) -> (i32, i32, i32) {
    %c0_i32 = arith.constant 0 : i32
    %c0_i32_0 = arith.constant 0 : i32
    %c0_i32_1 = arith.constant 0 : i32
    return %arg0, %c0_i32, %c0_i32_0 : i32, i32, i32
  }
  func.func @transform_1(%arg0: i32) -> (i32, i32) {
    %c0_i32 = arith.constant 0 : i32
    %c0_i32_0 = arith.constant 0 : i32
    %c0_i32_1 = arith.constant 0 : i32
    return %c0_i32, %c0_i32_0 : i32, i32
  }
  func.func @transform_2(%arg0: i32) -> (i32, i32) {
    %c0_i32 = arith.constant 0 : i32
    %c0_i32_0 = arith.constant 0 : i32
    %c0_i32_1 = arith.constant 0 : i32
    return %c0_i32, %c0_i32_0 : i32, i32
  }
  func.func @transform_3(%arg0: i32) -> (i32, i32) {
    %c0_i32 = arith.constant 0 : i32
    %c0_i32_0 = arith.constant 0 : i32
    %c0_i32_1 = arith.constant 0 : i32
    return %c0_i32, %c0_i32_0 : i32, i32
  }
  func.func @transform_4(%arg0: i32) -> (i32, i32, i32) {
    %c0_i32 = arith.constant 0 : i32
    %c0_i32_0 = arith.constant 0 : i32
    %c0_i32_1 = arith.constant 0 : i32
    return %arg0, %c0_i32, %c0_i32_0 : i32, i32, i32
  }
}

</mosaic_0001>

<llo_original>
// kernel: tpu_custom_call.1
$region0: #{tpu_custom_call.1}
  #allocation0 [shape = 'u32[]', space=smem, size = 0x4, offset = 0x4, fixed_abs, tag = 'smem constant byte address 0x4 - core index']
  #allocation1 [shape = 'u32[144,128]{1,0:T(1,128)}', space=vmem, size = 0x12000, scoped, tag = 'internal scratch']
  #allocation2 [shape = 'f32[72,256]{1,0:T(8,128)}', space=vmem, size = 0x12000, scoped, tag = 'scratch operand']
  %s0 = inlined_call_operand.hbm [shape: f32[8,8,256], index: 0, kind: input, shape index: {}]
  %s1 = inlined_call_operand.hbm [shape: f32[16,72], index: 1, kind: input, shape index: {}]
  %s2 = inlined_call_operand.hbm [shape: f32[8,16], index: 2, kind: input, shape index: {}]
  %s3 = inlined_call_operand.hbm [shape: f32[9,256], index: 3, kind: input, shape index: {}]
  %s4 = inlined_call_operand.hbm [shape: f32[8,8,256], index: 4, kind: output, shape index: {}]
  %s5 = sld [smem:[#allocation0]]
  $region65: #{tpu_custom_call.1} parent=0
    _
  %s7 = ssub.s32 1, %s5
  %s8 = scalar_select 0, %s7, %s5
  $region1: #{tpu_custom_call.1} parent=0
    #allocation3 [shape = 'u8[65536]{0}', space=vmem, size = 0x10000, scoped, tag = 'input window, operand 0']
    #allocation4 [shape = 's32[2]{0}', space=sflag, size = 0x8, scoped, tag = 'scoped memory for tpu_custom_call.1']
    #allocation5 [shape = 's32[2]{0}', space=sflag, size = 0x8, scoped, tag = 'scoped memory for tpu_custom_call.1']
    #allocation6 [shape = 'u8[8192]{0}', space=vmem, size = 0x2000, scoped, tag = 'input window, operand 1, single buffered']
    #allocation7 [shape = 's32[1]{0}', space=sflag, size = 0x4, scoped, tag = 'scoped memory for tpu_custom_call.1']
    #allocation8 [shape = 'u8[4096]{0}', space=vmem, size = 0x1000, scoped, tag = 'input window, operand 2, single buffered']
    #allocation9 [shape = 'u8[16384]{0}', space=vmem, size = 0x4000, scoped, tag = 'input window, operand 3, single buffered']
    #allocation10 [shape = 's32[1]{0}', space=sflag, size = 0x4, scoped, tag = 'scoped memory for tpu_custom_call.1']
    #allocation11 [shape = 'u8[65536]{0}', space=vmem, size = 0x10000, scoped, tag = 'output window, operand 0']
    %9 = vsyncpa [#allocation4], 0
    %s10 = scalar_lea.sflag [#allocation4], 1
    %11 = vsyncpa %s10, 0
    %12 = vsyncpa [#allocation7], 0
    %13 = vsyncpa [#allocation10], 0
    %14 = vsyncpa [#allocation5], 0
    %s15 = scalar_lea.sflag [#allocation5], 1
    %16 = vsyncpa %s15, 0
    loop: start=0, step=1, limit=4
    $region2: #{tpu_custom_call.1} parent=1 // loop_pre_header
      _
    $region3: #{tpu_custom_call.1} parent=1 // loop_header
      %s18 = sphi 0, %s22
      %p19 = scmp.ge.s32.totalorder %s18, 4
      %s28 = sphi 0, %s30
      %s31 = sphi 0, %s28
      %s32 = sphi 0, %s31
      %s48 = sphi 0, %s32
      %s52 = sphi 0, %s52
      %s54 = sphi 0, %s52
      %s55 = sphi 0, %s54
      %s69 = sphi 0, %s55
      %s73 = sphi 0, %s73
      %s75 = sphi 0, %s73
      %s76 = sphi 0, %s75
      %s90 = sphi 0, %s76
      %s94 = sphi 0, %s94
      %s96 = sphi 0, %s94
      %s97 = sphi 0, %s96
      %s111 = sphi 0, %s97
      %s117 = sphi 0, %s119
      %s120 = sphi 0, %s117
      %s121 = sphi 0, %s120
      %s137 = sphi 0, %s121
    $region4: #{tpu_custom_call.1} parent=1 // loop_header_branch
      %21 = sbr.rel (%p19) target = $region8
    $region5: #{tpu_custom_call.1} parent=1 // loop_body
      %s23 = ssub.s32 %s18, 1
      %s24 = ssub.s32 %s18, 2
      %s25 = sadd.s32 %s18, 1
      %s26 = ssub.s32 %s18, %s25
      %p27 = scmp.eq.s32.totalorder %s26, 0
      %s29 = sadd.s32 %s28, 1
      %s30 = scalar_select %p27, %s28, %s29
      %p33 = pneg %p27
      %p34 = scmp.eq.s32.totalorder %s18, 1
      %p35 = por %p33, %p34
      %p36 = scmp.ne.s32.totalorder %s28, %s31
      %p37 = scmp.eq.s32.totalorder %s18, 0
      %p38 = por %p36, %p37
      %p39 = scmp.ne.s32.totalorder %s28, %s31
      %p40 = scmp.eq.s32.totalorder %s23, 1
      %p41 = por %p39, %p40
      %p42 = scmp.ne.s32.totalorder %s31, %s32
      %p43 = scmp.eq.s32.totalorder %s23, 0
      %p44 = por %p42, %p43
      %p45 = scmp.ne.s32.totalorder %s31, %s32
      %p46 = scmp.eq.s32.totalorder %s24, 1
      %p47 = por %p45, %p46
      %p49 = scmp.ne.s32.totalorder %s32, %s48
      %p50 = scmp.eq.s32.totalorder %s24, 0
      %p51 = por %p49, %p50
      %s53 = sadd.s32 %s52, 1
      %p56 = scmp.eq.s32.totalorder %s18, 1
      %p57 = scmp.ne.s32.totalorder %s52, %s54
      %p58 = scmp.eq.s32.totalorder %s18, 0
      %p59 = por %p57, %p58
      %p60 = scmp.ne.s32.totalorder %s52, %s54
      %p61 = scmp.eq.s32.totalorder %s23, 1
      %p62 = por %p60, %p61
      %p63 = scmp.ne.s32.totalorder %s54, %s55
      %p64 = scmp.eq.s32.totalorder %s23, 0
      %p65 = por %p63, %p64
      %p66 = scmp.ne.s32.totalorder %s54, %s55
      %p67 = scmp.eq.s32.totalorder %s24, 1
      %p68 = por %p66, %p67
      %p70 = scmp.ne.s32.totalorder %s55, %s69
      %p71 = scmp.eq.s32.totalorder %s24, 0
      %p72 = por %p70, %p71
      %s74 = sadd.s32 %s73, 1
      %p77 = scmp.eq.s32.totalorder %s18, 1
      %p78 = scmp.ne.s32.totalorder %s73, %s75
      %p79 = scmp.eq.s32.totalorder %s18, 0
      %p80 = por %p78, %p79
      %p81 = scmp.ne.s32.totalorder %s73, %s75
      %p82 = scmp.eq.s32.totalorder %s23, 1
      %p83 = por %p81, %p82
      %p84 = scmp.ne.s32.totalorder %s75, %s76
      %p85 = scmp.eq.s32.totalorder %s23, 0
      %p86 = por %p84, %p85
      %p87 = scmp.ne.s32.totalorder %s75, %s76
      %p88 = scmp.eq.s32.totalorder %s24, 1
      %p89 = por %p87, %p88
      %p91 = scmp.ne.s32.totalorder %s76, %s90
      %p92 = scmp.eq.s32.totalorder %s24, 0
      %p93 = por %p91, %p92
      %s95 = sadd.s32 %s94, 1
      %p98 = scmp.eq.s32.totalorder %s18, 1
      %p99 = scmp.ne.s32.totalorder %s94, %s96
      %p100 = scmp.eq.s32.totalorder %s18, 0
      %p101 = por %p99, %p100
      %p102 = scmp.ne.s32.totalorder %s94, %s96
      %p103 = scmp.eq.s32.totalorder %s23, 1
      %p104 = por %p102, %p103
      %p105 = scmp.ne.s32.totalorder %s96, %s97
      %p106 = scmp.eq.s32.totalorder %s23, 0
      %p107 = por %p105, %p106
      %p108 = scmp.ne.s32.totalorder %s96, %s97
      %p109 = scmp.eq.s32.totalorder %s24, 1
      %p110 = por %p108, %p109
      %p112 = scmp.ne.s32.totalorder %s97, %s111
      %p113 = scmp.eq.s32.totalorder %s24, 0
      %p114 = por %p112, %p113
      %s115 = ssub.s32 %s18, %s25
      %p116 = scmp.eq.s32.totalorder %s115, 0
      %s118 = sadd.s32 %s117, 1
      %s119 = scalar_select %p116, %s117, %s118
      %p122 = pneg %p116
      %p123 = scmp.eq.s32.totalorder %s18, 1
      %p124 = por %p122, %p123
      %p125 = scmp.ne.s32.totalorder %s117, %s120
      %p126 = scmp.eq.s32.totalorder %s18, 0
      %p127 = por %p125, %p126
      %p128 = scmp.ne.s32.totalorder %s117, %s120
      %p129 = scmp.eq.s32.totalorder %s23, 1
      %p130 = por %p128, %p129
      %p131 = scmp.ne.s32.totalorder %s120, %s121
      %p132 = scmp.eq.s32.totalorder %s23, 0
      %p133 = por %p131, %p132
      %p134 = scmp.ne.s32.totalorder %s120, %s121
      %p135 = scmp.eq.s32.totalorder %s24, 1
      %p136 = por %p134, %p135
      %p138 = scmp.ne.s32.totalorder %s121, %s137
      %p139 = scmp.eq.s32.totalorder %s24, 0
      %p140 = por %p138, %p139
      %p141 = scmp.le.s32.totalorder 1, %s18
      %p142 = scmp.lt.s32.totalorder %s18, 3
      %p143 = pnand %p141, %p142
      %p144 = pneg %p143
      // Predicated region
      $region9: #{tpu_custom_call.1} parent=5 // pred_check
        _
      $region10: #{tpu_custom_call.1} parent=5 // pred_check_branch
        %146 = sbr.rel (%p143) target = $region12
      $region11: #{tpu_custom_call.1} parent=5 // pred_region
        %s147 = ssub.s32 %s18, 1
        // Predicated region
        $region13: #{tpu_custom_call.1} parent=11 // pred_check
          %p148 = pneg %p65
        $region14: #{tpu_custom_call.1} parent=11 // pred_check_branch
          %150 = sbr.rel (%p148) target = $region16
        $region15: #{tpu_custom_call.1} parent=11 // pred_region
          %s152 = ssub.s32 256, 256
          %153 = vsyncadd [#allocation7], %s152
          %s154 = sshll.u32 [#allocation6], 4
          %s155 = int_to_ptr.vmem [resolvable:$true] %s154
          %160 = dma.hbm_to_vmem [thread:$0]  %s1, 256, %s155, [#allocation7], 128, 128, 8
        $region16: #{tpu_custom_call.1} parent=11 // pred_fallthru
          _
        // Predicated region
        $region17: #{tpu_custom_call.1} parent=11 // pred_check
          %p161 = pneg %p86
        $region18: #{tpu_custom_call.1} parent=11 // pred_check_branch
          %163 = sbr.rel (%p161) target = $region20
        $region19: #{tpu_custom_call.1} parent=11 // pred_region
          %s165 = ssub.s32 128, 128
          %166 = vsyncadd [#allocation7], %s165
          %s168 = sshll.u32 [#allocation8], 4
          %s169 = int_to_ptr.vmem [resolvable:$true] %s168
          %171 = dma.hbm_to_vmem [thread:$0]  %s2, 128, %s169, [#allocation7]
        $region20: #{tpu_custom_call.1} parent=11 // pred_fallthru
          _
        // Predicated region
        $region21: #{tpu_custom_call.1} parent=11 // pred_check
          %p172 = pneg %p107
        $region22: #{tpu_custom_call.1} parent=11 // pred_check_branch
          %174 = sbr.rel (%p172) target = $region24
        $region23: #{tpu_custom_call.1} parent=11 // pred_region
          %s176 = ssub.s32 512, 512
          %177 = vsyncadd [#allocation10], %s176
          %s178 = sshll.u32 [#allocation9], 4
          %s179 = int_to_ptr.vmem [resolvable:$true] %s178
          %184 = dma.hbm_to_vmem [thread:$0]  %s3, 512, %s179, [#allocation10], 256, 256, 16
        $region24: #{tpu_custom_call.1} parent=11 // pred_fallthru
          _
      $region12: #{tpu_custom_call.1} parent=5 // pred_fallthru
        _
      %p185 = scmp.lt.s32.totalorder %s18, 2
      // Predicated region
      $region25: #{tpu_custom_call.1} parent=5 // pred_check
        %p186 = pneg %p185
      $region26: #{tpu_custom_call.1} parent=5 // pred_check_branch
        %188 = sbr.rel (%p186) target = $region28
      $region27: #{tpu_custom_call.1} parent=5 // pred_region
        // Predicated region
        $region29: #{tpu_custom_call.1} parent=27 // pred_check
          %p189 = pneg %p38
        $region30: #{tpu_custom_call.1} parent=27 // pred_check_branch
          %191 = sbr.rel (%p189) target = $region32
        $region31: #{tpu_custom_call.1} parent=27 // pred_region
          %s192 = sand.u32 %s28, 1
          %s193 = scalar_lea.sflag [#allocation4], %s192
          %s194 = sand.u32 %s28, 1
          %s195 = smul.addr %s194, 64
          %s196 = scalar_lea.vmem [#allocation3], %s195
          %s197 = smul.u32 4, %s18
          %s199 = ssub.s32 1024, 1024
          %200 = vsyncadd %s193, %s199
          %s201 = smul.addr %s197, 2
          %s202 = smul.addr %s201, 128
          %s203 = scalar_lea.hbm %s0, %s202
          %s204 = sshll.u32 %s196, 4
          %s205 = int_to_ptr.vmem [resolvable:$true] %s204
          %210 = dma.hbm_to_vmem [thread:$0]  %s203, 1024, %s205, %s193, 256, 256, 16
        $region32: #{tpu_custom_call.1} parent=27 // pred_fallthru
          _
      $region28: #{tpu_custom_call.1} parent=5 // pred_fallthru
        _
      %p211 = scmp.le.s32.totalorder 1, %s18
      %p212 = scmp.lt.s32.totalorder %s18, 3
      %p213 = pnand %p211, %p212
      %p214 = pneg %p213
      // Predicated region
      $region33: #{tpu_custom_call.1} parent=5 // pred_check
        _
      $region34: #{tpu_custom_call.1} parent=5 // pred_check_branch
        %216 = sbr.rel (%p213) target = $region36
      $region35: #{tpu_custom_call.1} parent=5 // pred_region
        %s217 = ssub.s32 %s18, 1
        %s218 = sand.u32 %s31, 1
        %s219 = scalar_lea.sflag [#allocation4], %s218
        %s220 = sand.u32 %s31, 1
        %s221 = smul.addr %s220, 64
        %s222 = scalar_lea.vmem [#allocation3], %s221
        // Predicated region
        $region37: #{tpu_custom_call.1} parent=35 // pred_check
          %p223 = pneg %p44
        $region38: #{tpu_custom_call.1} parent=35 // pred_check_branch
          %225 = sbr.rel (%p223) target = $region40
        $region39: #{tpu_custom_call.1} parent=35 // pred_region
          %226 = dma.done %s219, 1024
        $region40: #{tpu_custom_call.1} parent=35 // pred_fallthru
          _
        // Predicated region
        $region41: #{tpu_custom_call.1} parent=35 // pred_check
          %p227 = pneg %p65
        $region42: #{tpu_custom_call.1} parent=35 // pred_check_branch
          %229 = sbr.rel (%p227) target = $region44
        $region43: #{tpu_custom_call.1} parent=35 // pred_region
          %230 = dma.done [#allocation7], 256
        $region44: #{tpu_custom_call.1} parent=35 // pred_fallthru
          _
        // Predicated region
        $region45: #{tpu_custom_call.1} parent=35 // pred_check
          %p231 = pneg %p86
        $region46: #{tpu_custom_call.1} parent=35 // pred_check_branch
          %233 = sbr.rel (%p231) target = $region48
        $region47: #{tpu_custom_call.1} parent=35 // pred_region
          %234 = dma.done [#allocation7], 128
        $region48: #{tpu_custom_call.1} parent=35 // pred_fallthru
          _
        // Predicated region
        $region49: #{tpu_custom_call.1} parent=35 // pred_check
          %p235 = pneg %p107
        $region50: #{tpu_custom_call.1} parent=35 // pred_check_branch
          %237 = sbr.rel (%p235) target = $region52
        $region51: #{tpu_custom_call.1} parent=35 // pred_region
          %238 = dma.done [#allocation10], 512
        $region52: #{tpu_custom_call.1} parent=35 // pred_fallthru
          _
        %s239 = sand.u32 %s31, 1
        %s240 = scalar_lea.sflag [#allocation4], %s239
        %s241 = sand.u32 %s31, 1
        %s242 = smul.addr %s241, 64
        %s243 = scalar_lea.vmem [#allocation3], %s242
        %p244 = pneg %p44
        %p245 = pneg %p41
        %p246 = pneg %p65
        %p247 = pneg %p62
        %p248 = pneg %p86
        %p249 = pneg %p83
        %p250 = pneg %p107
        %p251 = pneg %p104
        %p252 = pneg %p133
        %p253 = pneg %p130
        %s254 = sand.u32 %s120, 1
        %s255 = scalar_lea.sflag [#allocation5], %s254
        %s256 = sand.u32 %s120, 1
        %s257 = smul.addr %s256, 64
        %s258 = scalar_lea.vmem [#allocation11], %s257
        %s259 = smul.u32 4, %s23
        %s260 = smul.u32 4, %s23
        %v261 = vld [vmem:[#allocation6] sm:$0xff]
        %v262 = vld [vmem:[#allocation6 + $0x8] sm:$0xff]
        %v263 = vld [vmem:[#allocation8] sm:$0xff]
        %v264 = vld [vmem:[#allocation9] sm:$0xff]
        %v265 = vld [vmem:[#allocation9 + $0x8] sm:$0xff]
        %v266 = vld [vmem:[#allocation9 + $0x10] sm:$0x1]
        %v267 = vld [vmem:[#allocation9 + $0x18] sm:$0x1]
        %v268 = vld [vmem:[%s222] sm:$0xff]
        %v269 = vld [vmem:[%s222 + $0x8] sm:$0xff]
        %v270 = vmax.f32 %v268, 0.0
        %v271 = vmax.f32 %v269, 0.0
        %272 = vrot.lane.b32.xlu0 %v270, 17
        %v273 = vpop.permute.xlu0 %272
        %274 = vrot.lane.b32.xlu0 %v271, 17
        %v275 = vpop.permute.xlu0 %274
        %v276 = vlaneseq
        %v277 = vand.u32 %v276, 127
        %vm278 = vcmp.lt.s32.totalorder %v277, 17
        %v279 = vsel %vm278, %v273, %v275
        %v280 = vsel %vm278, %v275, %v273
        %v281 = vlaneseq
        %v282 = vshrl.u32 %v281, 7
        %v283 = vsub.s32 0, %v282
        %v284 = vrot.slane %v264, %v283
        %v285 = vlaneseq
        %v286 = vshrl.u32 %v285, 7
        %v287 = vsub.s32 0, %v286
        %v288 = vrot.slane %v265, %v287
        %v289 = vmul.f32 %v280, %v284
        %v290 = vmul.f32 %v279, %v288
        %291 = vst [vmem:[#allocation2] sm:$0xff] %v289
        %292 = vst [vmem:[#allocation2 + $0x8] sm:$0xff] %v290
        %293 = vrot.lane.b32.xlu0 %v270, 16
        %v294 = vpop.permute.xlu0 %293
        %295 = vrot.lane.b32.xlu0 %v271, 16
        %v296 = vpop.permute.xlu0 %295
        %vm297 = vcmp.lt.s32.totalorder %v277, 16
        %v298 = vsel %vm297, %v294, %v296
        %v299 = vsel %vm297, %v296, %v294
        %v300 = vlaneseq
        %v301 = vshrl.u32 %v300, 7
        %v302 = vsub.s32 1, %v301
        %v303 = vrot.slane %v264, %v302
        %v304 = vlaneseq
        %v305 = vshrl.u32 %v304, 7
        %v306 = vsub.s32 1, %v305
        %v307 = vrot.slane %v265, %v306
        %v308 = vmul.f32 %v299, %v303
        %v309 = vmul.f32 %v298, %v307
        %310 = vst [vmem:[#allocation2 + $0x10] sm:$0xff] %v308
        %311 = vst [vmem:[#allocation2 + $0x18] sm:$0xff] %v309
        %312 = vrot.lane.b32.xlu0 %v270, 15
        %v313 = vpop.permute.xlu0 %312
        %314 = vrot.lane.b32.xlu0 %v271, 15
        %v315 = vpop.permute.xlu0 %314
        %vm316 = vcmp.lt.s32.totalorder %v277, 15
        %v317 = vsel %vm316, %v313, %v315
        %v318 = vsel %vm316, %v315, %v313
        %v319 = vlaneseq
        %v320 = vshrl.u32 %v319, 7
        %v321 = vsub.s32 2, %v320
        %v322 = vrot.slane %v264, %v321
        %v323 = vlaneseq
        %v324 = vshrl.u32 %v323, 7
        %v325 = vsub.s32 2, %v324
        %v326 = vrot.slane %v265, %v325
        %v327 = vmul.f32 %v318, %v322
        %v328 = vmul.f32 %v317, %v326
        %329 = vst [vmem:[#allocation2 + $0x20] sm:$0xff] %v327
        %330 = vst [vmem:[#allocation2 + $0x28] sm:$0xff] %v328
        %331 = vrot.lane.b32.xlu0 %v270, 1
        %v332 = vpop.permute.xlu0 %331
        %333 = vrot.lane.b32.xlu0 %v271, 1
        %v334 = vpop.permute.xlu0 %333
        %vm335 = vcmp.lt.s32.totalorder %v277, 1
        %v336 = vsel %vm335, %v332, %v334
        %v337 = vsel %vm335, %v334, %v332
        %v338 = vlaneseq
        %v339 = vshrl.u32 %v338, 7
        %v340 = vsub.s32 3, %v339
        %v341 = vrot.slane %v264, %v340
        %v342 = vlaneseq
        %v343 = vshrl.u32 %v342, 7
        %v344 = vsub.s32 3, %v343
        %v345 = vrot.slane %v265, %v344
        %v346 = vmul.f32 %v337, %v341
        %v347 = vmul.f32 %v336, %v345
        %348 = vst [vmem:[#allocation2 + $0x30] sm:$0xff] %v346
        %349 = vst [vmem:[#allocation2 + $0x38] sm:$0xff] %v347
        %350 = vst [vmem:[#allocation2 + $0x40] sm:$0xff] %v270
        %351 = vst [vmem:[#allocation2 + $0x48] sm:$0xff] %v271
        %352 = vrot.lane.b32.xlu0 %v270, 127
        %v353 = vpop.permute.xlu0 %352
        %354 = vrot.lane.b32.xlu0 %v271, 127
        %v355 = vpop.permute.xlu0 %354
        %vm356 = vcmp.lt.s32.totalorder %v277, 127
        %v357 = vsel %vm356, %v353, %v355
        %v358 = vsel %vm356, %v355, %v353
        %v359 = vlaneseq
        %v360 = vshrl.u32 %v359, 7
        %v361 = vsub.s32 5, %v360
        %v362 = vrot.slane %v264, %v361
        %v363 = vlaneseq
        %v364 = vshrl.u32 %v363, 7
        %v365 = vsub.s32 5, %v364
        %v366 = vrot.slane %v265, %v365
        %v367 = vmul.f32 %v357, %v362
        %v368 = vmul.f32 %v358, %v366
        %369 = vst [vmem:[#allocation2 + $0x50] sm:$0xff] %v367
        %370 = vst [vmem:[#allocation2 + $0x58] sm:$0xff] %v368
        %371 = vrot.lane.b32.xlu0 %v270, 113
        %v372 = vpop.permute.xlu0 %371
        %373 = vrot.lane.b32.xlu0 %v271, 113
        %v374 = vpop.permute.xlu0 %373
        %vm375 = vcmp.lt.s32.totalorder %v277, 113
        %v376 = vsel %vm375, %v372, %v374
        %v377 = vsel %vm375, %v374, %v372
        %v378 = vlaneseq
        %v379 = vshrl.u32 %v378, 7
        %v380 = vsub.s32 6, %v379
        %v381 = vrot.slane %v264, %v380
        %v382 = vlaneseq
        %v383 = vshrl.u32 %v382, 7
        %v384 = vsub.s32 6, %v383
        %v385 = vrot.slane %v265, %v384
        %v386 = vmul.f32 %v376, %v381
        %v387 = vmul.f32 %v377, %v385
        %388 = vst [vmem:[#allocation2 + $0x60] sm:$0xff] %v386
        %389 = vst [vmem:[#allocation2 + $0x68] sm:$0xff] %v387
        %390 = vrot.lane.b32.xlu0 %v270, 112
        %v391 = vpop.permute.xlu0 %390
        %392 = vrot.lane.b32.xlu0 %v271, 112
        %v393 = vpop.permute.xlu0 %392
        %vm394 = vcmp.lt.s32.totalorder %v277, 112
        %v395 = vsel %vm394, %v391, %v393
        %v396 = vsel %vm394, %v393, %v391
        %v397 = vlaneseq
        %v398 = vshrl.u32 %v397, 7
        %v399 = vsub.s32 7, %v398
        %v400 = vrot.slane %v264, %v399
        %v401 = vlaneseq
        %v402 = vshrl.u32 %v401, 7
        %v403 = vsub.s32 7, %v402
        %v404 = vrot.slane %v265, %v403
        %v405 = vmul.f32 %v395, %v400
        %v406 = vmul.f32 %v396, %v404
        %407 = vst [vmem:[#allocation2 + $0x70] sm:$0xff] %v405
        %408 = vst [vmem:[#allocation2 + $0x78] sm:$0xff] %v406
        %409 = vrot.lane.b32.xlu0 %v270, 111
        %v410 = vpop.permute.xlu0 %409
        %411 = vrot.lane.b32.xlu0 %v271, 111
        %v412 = vpop.permute.xlu0 %411
        %vm413 = vcmp.lt.s32.totalorder %v277, 111
        %v414 = vsel %vm413, %v410, %v412
        %v415 = vsel %vm413, %v412, %v410
        %v416 = vlaneseq
        %v417 = vshrl.u32 %v416, 7
        %v418 = vsub.s32 0, %v417
        %v419 = vrot.slane %v266, %v418
        %v420 = vlaneseq
        %v421 = vshrl.u32 %v420, 7
        %v422 = vsub.s32 0, %v421
        %v423 = vrot.slane %v267, %v422
        %v424 = vmul.f32 %v414, %v419
        %v425 = vmul.f32 %v415, %v423
        %426 = vst [vmem:[#allocation2 + $0x80] sm:$0xff] %v424
        %427 = vst [vmem:[#allocation2 + $0x88] sm:$0xff] %v425
        %v428 = vld [vmem:[#allocation2] sm:$0xff]
        %v429 = vld [vmem:[#allocation2 + $0x8] sm:$0xff]
        %v430 = vld [vmem:[#allocation2 + $0x10] sm:$0xff]
        %v431 = vld [vmem:[#allocation2 + $0x18] sm:$0xff]
        %v432 = vld [vmem:[#allocation2 + $0x20] sm:$0xff]
        %v433 = vld [vmem:[#allocation2 + $0x28] sm:$0xff]
        %v434 = vld [vmem:[#allocation2 + $0x30] sm:$0xff]
        %v435 = vld [vmem:[#allocation2 + $0x38] sm:$0xff]
        %v436 = vld [vmem:[#allocation2 + $0x40] sm:$0xff]
        %v437 = vld [vmem:[#allocation2 + $0x48] sm:$0xff]
        %v438 = vld [vmem:[#allocation2 + $0x50] sm:$0xff]
        %v439 = vld [vmem:[#allocation2 + $0x58] sm:$0xff]
        %v440 = vld [vmem:[#allocation2 + $0x60] sm:$0xff]
        %v441 = vld [vmem:[#allocation2 + $0x68] sm:$0xff]
        %v442 = vld [vmem:[#allocation2 + $0x70] sm:$0xff]
        %v443 = vld [vmem:[#allocation2 + $0x78] sm:$0xff]
        %v444 = vld [vmem:[#allocation2 + $0x80] sm:$0xff]
        %v445 = vld [vmem:[#allocation2 + $0x88] sm:$0xff]
        %vm446 = vcmask 588800
        %v448 = vsel %vm446, %v261, 0
        %v451 = vsel %vm446, %v262, 0
        %453 = vmatprep.subr.mxu0 0.0
        %454 = vmatpush1.msra.mxu0 0.0
        %455 = vmatprep.subr.mxu0 0.0
        %456 = vmatpush1.msra.mxu0 0.0
        %457 = vmatprep.subr.mxu0 0.0
        %458 = vmatpush1.msra.mxu0 0.0
        %459 = vmatprep.subr.mxu0 0.0
        %460 = vmatpush1.msra.mxu0 0.0
        %461 = vmatprep.subr.mxu0 0.0
        %462 = vmatpush1.msra.mxu0 0.0
        %463 = vmatprep.subr.mxu0 0.0
        %464 = vmatpush1.msra.mxu0 0.0
        %465 = vmatprep.subr.mxu0 0.0
        %466 = vmatpush1.msra.mxu0 0.0
        %467 = vmatprep.subr.mxu0 %v445
        %468 = vmatpush1.msra.mxu0 %v444
        %469 = vmatprep.subr.mxu0 %v443
        %470 = vmatpush1.msra.mxu0 %v442
        %471 = vmatprep.subr.mxu0 %v441
        %472 = vmatpush1.msra.mxu0 %v440
        %473 = vmatprep.subr.mxu0 %v439
        %474 = vmatpush1.msra.mxu0 %v438
        %475 = vmatprep.subr.mxu0 %v437
        %476 = vmatpush1.msra.mxu0 %v436
        %477 = vmatprep.subr.mxu0 %v435
        %478 = vmatpush1.msra.mxu0 %v434
        %479 = vmatprep.subr.mxu0 %v433
        %480 = vmatpush1.msra.mxu0 %v432
        %481 = vmatprep.subr.mxu0 %v431
        %482 = vmatpush1.msra.mxu0 %v430
        %483 = vmatprep.subr.mxu0 %v429
        %484 = vmatpush1.msra.mxu0 %v428
        %485 = vmatprep.subr.mxu0 0.0
        %486 = vmatpush2.msra.mxu0 0.0
        %487 = vmatprep.subr.mxu0 0.0
        %488 = vmatpush2.msra.mxu0 0.0
        %489 = vmatprep.subr.mxu0 0.0
        %490 = vmatpush2.msra.mxu0 0.0
        %491 = vmatprep.subr.mxu0 0.0
        %492 = vmatpush2.msra.mxu0 0.0
        %493 = vmatprep.subr.mxu0 0.0
        %494 = vmatpush2.msra.mxu0 0.0
        %495 = vmatprep.subr.mxu0 0.0
        %496 = vmatpush2.msra.mxu0 0.0
        %497 = vmatprep.subr.mxu0 0.0
        %498 = vmatpush2.msra.mxu0 0.0
        %499 = vmatprep.subr.mxu0 0.0
        %500 = vmatpush2.msra.mxu0 0.0
        %501 = vmatprep.subr.mxu0 0.0
        %502 = vmatpush2.msra.mxu0 0.0
        %503 = vmatprep.subr.mxu0 0.0
        %504 = vmatpush2.msra.mxu0 0.0
        %505 = vmatprep.subr.mxu0 0.0
        %506 = vmatpush2.msra.mxu0 0.0
        %507 = vmatprep.subr.mxu0 0.0
        %508 = vmatpush2.msra.mxu0 0.0
        %509 = vmatprep.subr.mxu0 0.0
        %510 = vmatpush2.msra.mxu0 0.0
        %511 = vmatprep.subr.mxu0 0.0
        %512 = vmatpush2.msra.mxu0 0.0
        %513 = vmatprep.subr.mxu0 0.0
        %514 = vmatpush2.msra.mxu0 0.0
        %515 = vmatprep.subr.mxu0 0.0
        %516 = vmatpush2.msra.mxu0 0.0
        %517 = vmatprep.mubr.f32.mxu0 0.0
        %518 = vmatmul.mubr.f32.gmra.mxu0 %v448
        %v519 = vpop.f32.mrf.mxu0
        %v520 = vadd.f32 0.0, %v519
        %v521 = vpop.f32.mrf.mxu0
        %v522 = vadd.f32 0.0, %v521
        %523 = vmatprep.mubr.f32.mxu0 0.0
        %524 = vmatmul.mubr.f32.gmra.mxu0 %v451
        %v525 = vpop.f32.mrf.mxu0
        %v526 = vadd.f32 0.0, %v525
        %v527 = vpop.f32.mrf.mxu0
        %v528 = vadd.f32 0.0, %v527
        %529 = vdwg.mxu0
        %v530 = vmax.f32 %v520, 0.0
        %v531 = vmax.f32 %v522, 0.0
        %v532 = vmax.f32 %v526, 0.0
        %v533 = vmax.f32 %v528, 0.0
        %vm534 = vcmask 130048
        %v536 = vsel %vm534, %v263, 0
        %538 = vmatprep.subr.mxu0 0.0
        %539 = vmatpush1.msra.mxu0 0.0
        %540 = vmatprep.subr.mxu0 0.0
        %541 = vmatpush1.msra.mxu0 0.0
        %542 = vmatprep.subr.mxu0 0.0
        %543 = vmatpush1.msra.mxu0 0.0
        %544 = vmatprep.subr.mxu0 0.0
        %545 = vmatpush1.msra.mxu0 0.0
        %546 = vmatprep.subr.mxu0 0.0
        %547 = vmatpush1.msra.mxu0 0.0
        %548 = vmatprep.subr.mxu0 0.0
        %549 = vmatpush1.msra.mxu0 0.0
        %550 = vmatprep.subr.mxu0 0.0
        %551 = vmatpush1.msra.mxu0 0.0
        %552 = vmatprep.subr.mxu0 0.0
        %553 = vmatpush1.msra.mxu0 0.0
        %554 = vmatprep.subr.mxu0 0.0
        %555 = vmatpush1.msra.mxu0 0.0
        %556 = vmatprep.subr.mxu0 0.0
        %557 = vmatpush1.msra.mxu0 0.0
        %558 = vmatprep.subr.mxu0 0.0
        %559 = vmatpush1.msra.mxu0 0.0
        %560 = vmatprep.subr.mxu0 0.0
        %561 = vmatpush1.msra.mxu0 0.0
        %562 = vmatprep.subr.mxu0 0.0
        %563 = vmatpush1.msra.mxu0 0.0
        %564 = vmatprep.subr.mxu0 0.0
        %565 = vmatpush1.msra.mxu0 0.0
        %566 = vmatprep.subr.mxu0 %v533
        %567 = vmatpush1.msra.mxu0 %v532
        %568 = vmatprep.subr.mxu0 %v531
        %569 = vmatpush1.msra.mxu0 %v530
        %570 = vmatprep.subr.mxu0 0.0
        %571 = vmatpush2.msra.mxu0 0.0
        %572 = vmatprep.subr.mxu0 0.0
        %573 = vmatpush2.msra.mxu0 0.0
        %574 = vmatprep.subr.mxu0 0.0
        %575 = vmatpush2.msra.mxu0 0.0
        %576 = vmatprep.subr.mxu0 0.0
        %577 = vmatpush2.msra.mxu0 0.0
        %578 = vmatprep.subr.mxu0 0.0
        %579 = vmatpush2.msra.mxu0 0.0
        %580 = vmatprep.subr.mxu0 0.0
        %581 = vmatpush2.msra.mxu0 0.0
        %582 = vmatprep.subr.mxu0 0.0
        %583 = vmatpush2.msra.mxu0 0.0
        %584 = vmatprep.subr.mxu0 0.0
        %585 = vmatpush2.msra.mxu0 0.0
        %586 = vmatprep.subr.mxu0 0.0
        %587 = vmatpush2.msra.mxu0 0.0
        %588 = vmatprep.subr.mxu0 0.0
        %589 = vmatpush2.msra.mxu0 0.0
        %590 = vmatprep.subr.mxu0 0.0
        %591 = vmatpush2.msra.mxu0 0.0
        %592 = vmatprep.subr.mxu0 0.0
        %593 = vmatpush2.msra.mxu0 0.0
        %594 = vmatprep.subr.mxu0 0.0
        %595 = vmatpush2.msra.mxu0 0.0
        %596 = vmatprep.subr.mxu0 0.0
        %597 = vmatpush2.msra.mxu0 0.0
        %598 = vmatprep.subr.mxu0 0.0
        %599 = vmatpush2.msra.mxu0 0.0
        %600 = vmatprep.subr.mxu0 0.0
        %601 = vmatpush2.msra.mxu0 0.0
        %602 = vmatprep.mubr.f32.mxu0 0.0
        %603 = vmatmul.mubr.f32.gmra.mxu0 %v536
        %v604 = vpop.f32.mrf.mxu0
        %v605 = vadd.f32 0.0, %v604
        %v606 = vpop.f32.mrf.mxu0
        %v607 = vadd.f32 0.0, %v606
        %608 = vdwg.mxu0
        %v609 = vadd.f32 %v268, %v605
        %v610 = vadd.f32 %v269, %v607
        %611 = vst [vmem:[%s258] sm:$0xff] %v609
        %612 = vst [vmem:[%s258 + $0x8] sm:$0xff] %v610
        %s613 = scalar_lea.vmem %s222, 16 [#allocation3]
        %v614 = vld [vmem:[%s613] sm:$0xff]
        %v615 = vld [vmem:[%s613 + $0x8] sm:$0xff]
        %v616 = vmax.f32 %v614, 0.0
        %v617 = vmax.f32 %v615, 0.0
        %618 = vrot.lane.b32.xlu0 %v616, 17
        %v619 = vpop.permute.xlu0 %618
        %620 = vrot.lane.b32.xlu0 %v617, 17
        %v621 = vpop.permute.xlu0 %620
        %v622 = vsel %vm278, %v619, %v621
        %v623 = vsel %vm278, %v621, %v619
        %v624 = vmul.f32 %v623, %v284
        %v625 = vmul.f32 %v622, %v288
        %626 = vst [vmem:[#allocation2] sm:$0xff] %v624
        %627 = vst [vmem:[#allocation2 + $0x8] sm:$0xff] %v625
        %628 = vrot.lane.b32.xlu0 %v616, 16
        %v629 = vpop.permute.xlu0 %628
        %630 = vrot.lane.b32.xlu0 %v617, 16
        %v631 = vpop.permute.xlu0 %630
        %v632 = vsel %vm297, %v629, %v631
        %v633 = vsel %vm297, %v631, %v629
        %v634 = vmul.f32 %v633, %v303
        %v635 = vmul.f32 %v632, %v307
        %636 = vst [vmem:[#allocation2 + $0x10] sm:$0xff] %v634
        %637 = vst [vmem:[#allocation2 + $0x18] sm:$0xff] %v635
        %638 = vrot.lane.b32.xlu0 %v616, 15
        %v639 = vpop.permute.xlu0 %638
        %640 = vrot.lane.b32.xlu0 %v617, 15
        %v641 = vpop.permute.xlu0 %640
        %v642 = vsel %vm316, %v639, %v641
        %v643 = vsel %vm316, %v641, %v639
        %v644 = vmul.f32 %v643, %v322
        %v645 = vmul.f32 %v642, %v326
        %646 = vst [vmem:[#allocation2 + $0x20] sm:$0xff] %v644
        %647 = vst [vmem:[#allocation2 + $0x28] sm:$0xff] %v645
        %648 = vrot.lane.b32.xlu0 %v616, 1
        %v649 = vpop.permute.xlu0 %648
        %650 = vrot.lane.b32.xlu0 %v617, 1
        %v651 = vpop.permute.xlu0 %650
        %v652 = vsel %vm335, %v649, %v651
        %v653 = vsel %vm335, %v651, %v649
        %v654 = vmul.f32 %v653, %v341
        %v655 = vmul.f32 %v652, %v345
        %656 = vst [vmem:[#allocation2 + $0x30] sm:$0xff] %v654
        %657 = vst [vmem:[#allocation2 + $0x38] sm:$0xff] %v655
        %658 = vst [vmem:[#allocation2 + $0x40] sm:$0xff] %v616
        %659 = vst [vmem:[#allocation2 + $0x48] sm:$0xff] %v617
        %660 = vrot.lane.b32.xlu0 %v616, 127
        %v661 = vpop.permute.xlu0 %660
        %662 = vrot.lane.b32.xlu0 %v617, 127
        %v663 = vpop.permute.xlu0 %662
        %v664 = vsel %vm356, %v661, %v663
        %v665 = vsel %vm356, %v663, %v661
        %v666 = vmul.f32 %v664, %v362
        %v667 = vmul.f32 %v665, %v366
        %668 = vst [vmem:[#allocation2 + $0x50] sm:$0xff] %v666
        %669 = vst [vmem:[#allocation2 + $0x58] sm:$0xff] %v667
        %670 = vrot.lane.b32.xlu0 %v616, 113
        %v671 = vpop.permute.xlu0 %670
        %672 = vrot.lane.b32.xlu0 %v617, 113
        %v673 = vpop.permute.xlu0 %672
        %v674 = vsel %vm375, %v671, %v673
        %v675 = vsel %vm375, %v673, %v671
        %v676 = vmul.f32 %v674, %v381
        %v677 = vmul.f32 %v675, %v385
        %678 = vst [vmem:[#allocation2 + $0x60] sm:$0xff] %v676
        %679 = vst [vmem:[#allocation2 + $0x68] sm:$0xff] %v677
        %680 = vrot.lane.b32.xlu0 %v616, 112
        %v681 = vpop.permute.xlu0 %680
        %682 = vrot.lane.b32.xlu0 %v617, 112
        %v683 = vpop.permute.xlu0 %682
        %v684 = vsel %vm394, %v681, %v683
        %v685 = vsel %vm394, %v683, %v681
        %v686 = vmul.f32 %v684, %v400
        %v687 = vmul.f32 %v685, %v404
        %688 = vst [vmem:[#allocation2 + $0x70] sm:$0xff] %v686
        %689 = vst [vmem:[#allocation2 + $0x78] sm:$0xff] %v687
        %690 = vrot.lane.b32.xlu0 %v616, 111
        %v691 = vpop.permute.xlu0 %690
        %692 = vrot.lane.b32.xlu0 %v617, 111
        %v693 = vpop.permute.xlu0 %692
        %v694 = vsel %vm413, %v691, %v693
        %v695 = vsel %vm413, %v693, %v691
        %v696 = vmul.f32 %v694, %v419
        %v697 = vmul.f32 %v695, %v423
        %698 = vst [vmem:[#allocation2 + $0x80] sm:$0xff] %v696
        %699 = vst [vmem:[#allocation2 + $0x88] sm:$0xff] %v697
        %v700 = vld [vmem:[#allocation2] sm:$0xff]
        %v701 = vld [vmem:[#allocation2 + $0x8] sm:$0xff]
        %v702 = vld [vmem:[#allocation2 + $0x10] sm:$0xff]
        %v703 = vld [vmem:[#allocation2 + $0x18] sm:$0xff]
        %v704 = vld [vmem:[#allocation2 + $0x20] sm:$0xff]
        %v705 = vld [vmem:[#allocation2 + $0x28] sm:$0xff]
        %v706 = vld [vmem:[#allocation2 + $0x30] sm:$0xff]
        %v707 = vld [vmem:[#allocation2 + $0x38] sm:$0xff]
        %v708 = vld [vmem:[#allocation2 + $0x40] sm:$0xff]
        %v709 = vld [vmem:[#allocation2 + $0x48] sm:$0xff]
        %v710 = vld [vmem:[#allocation2 + $0x50] sm:$0xff]
        %v711 = vld [vmem:[#allocation2 + $0x58] sm:$0xff]
        %v712 = vld [vmem:[#allocation2 + $0x60] sm:$0xff]
        %v713 = vld [vmem:[#allocation2 + $0x68] sm:$0xff]
        %v714 = vld [vmem:[#allocation2 + $0x70] sm:$0xff]
        %v715 = vld [vmem:[#allocation2 + $0x78] sm:$0xff]
        %v716 = vld [vmem:[#allocation2 + $0x80] sm:$0xff]
        %v717 = vld [vmem:[#allocation2 + $0x88] sm:$0xff]
        %718 = vmatprep.subr.mxu0 0.0
        %719 = vmatpush1.msra.mxu0 0.0
        %720 = vmatprep.subr.mxu0 0.0
        %721 = vmatpush1.msra.mxu0 0.0
        %722 = vmatprep.subr.mxu0 0.0
        %723 = vmatpush1.msra.mxu0 0.0
        %724 = vmatprep.subr.mxu0 0.0
        %725 = vmatpush1.msra.mxu0 0.0
        %726 = vmatprep.subr.mxu0 0.0
        %727 = vmatpush1.msra.mxu0 0.0
        %728 = vmatprep.subr.mxu0 0.0
        %729 = vmatpush1.msra.mxu0 0.0
        %730 = vmatprep.subr.mxu0 0.0
        %731 = vmatpush1.msra.mxu0 0.0
        %732 = vmatprep.subr.mxu0 %v717
        %733 = vmatpush1.msra.mxu0 %v716
        %734 = vmatprep.subr.mxu0 %v715
        %735 = vmatpush1.msra.mxu0 %v714
        %736 = vmatprep.subr.mxu0 %v713
        %737 = vmatpush1.msra.mxu0 %v712
        %738 = vmatprep.subr.mxu0 %v711
        %739 = vmatpush1.msra.mxu0 %v710
        %740 = vmatprep.subr.mxu0 %v709
        %741 = vmatpush1.msra.mxu0 %v708
        %742 = vmatprep.subr.mxu0 %v707
        %743 = vmatpush1.msra.mxu0 %v706
        %744 = vmatprep.subr.mxu0 %v705
        %745 = vmatpush1.msra.mxu0 %v704
        %746 = vmatprep.subr.mxu0 %v703
        %747 = vmatpush1.msra.mxu0 %v702
        %748 = vmatprep.subr.mxu0 %v701
        %749 = vmatpush1.msra.mxu0 %v700
        %750 = vmatprep.subr.mxu0 0.0
        %751 = vmatpush2.msra.mxu0 0.0
        %752 = vmatprep.subr.mxu0 0.0
        %753 = vmatpush2.msra.mxu0 0.0
        %754 = vmatprep.subr.mxu0 0.0
        %755 = vmatpush2.msra.mxu0 0.0
        %756 = vmatprep.subr.mxu0 0.0
        %757 = vmatpush2.msra.mxu0 0.0
        %758 = vmatprep.subr.mxu0 0.0
        %759 = vmatpush2.msra.mxu0 0.0
        %760 = vmatprep.subr.mxu0 0.0
        %761 = vmatpush2.msra.mxu0 0.0
        %762 = vmatprep.subr.mxu0 0.0
        %763 = vmatpush2.msra.mxu0 0.0
        %764 = vmatprep.subr.mxu0 0.0
        %765 = vmatpush2.msra.mxu0 0.0
        %766 = vmatprep.subr.mxu0 0.0
        %767 = vmatpush2.msra.mxu0 0.0
        %768 = vmatprep.subr.mxu0 0.0
        %769 = vmatpush2.msra.mxu0 0.0
        %770 = vmatprep.subr.mxu0 0.0
        %771 = vmatpush2.msra.mxu0 0.0
        %772 = vmatprep.subr.mxu0 0.0
        %773 = vmatpush2.msra.mxu0 0.0
        %774 = vmatprep.subr.mxu0 0.0
        %775 = vmatpush2.msra.mxu0 0.0
        %776 = vmatprep.subr.mxu0 0.0
        %777 = vmatpush2.msra.mxu0 0.0
        %778 = vmatprep.subr.mxu0 0.0
        %779 = vmatpush2.msra.mxu0 0.0
        %780 = vmatprep.subr.mxu0 0.0
        %781 = vmatpush2.msra.mxu0 0.0
        %782 = vmatprep.mubr.f32.mxu0 0.0
        %783 = vmatmul.mubr.f32.gmra.mxu0 %v448
        %v784 = vpop.f32.mrf.mxu0
        %v785 = vadd.f32 0.0, %v784
        %v786 = vpop.f32.mrf.mxu0
        %v787 = vadd.f32 0.0, %v786
        %788 = vmatprep.mubr.f32.mxu0 0.0
        %789 = vmatmul.mubr.f32.gmra.mxu0 %v451
        %v790 = vpop.f32.mrf.mxu0
        %v791 = vadd.f32 0.0, %v790
        %v792 = vpop.f32.mrf.mxu0
        %v793 = vadd.f32 0.0, %v792
        %794 = vdwg.mxu0
        %v795 = vmax.f32 %v785, 0.0
        %v796 = vmax.f32 %v787, 0.0
        %v797 = vmax.f32 %v791, 0.0
        %v798 = vmax.f32 %v793, 0.0
        %799 = vmatprep.subr.mxu0 0.0
        %800 = vmatpush1.msra.mxu0 0.0
        %801 = vmatprep.subr.mxu0 0.0
        %802 = vmatpush1.msra.mxu0 0.0
        %803 = vmatprep.subr.mxu0 0.0
        %804 = vmatpush1.msra.mxu0 0.0
        %805 = vmatprep.subr.mxu0 0.0
        %806 = vmatpush1.msra.mxu0 0.0
        %807 = vmatprep.subr.mxu0 0.0
        %808 = vmatpush1.msra.mxu0 0.0
        %809 = vmatprep.subr.mxu0 0.0
        %810 = vmatpush1.msra.mxu0 0.0
        %811 = vmatprep.subr.mxu0 0.0
        %812 = vmatpush1.msra.mxu0 0.0
        %813 = vmatprep.subr.mxu0 0.0
        %814 = vmatpush1.msra.mxu0 0.0
        %815 = vmatprep.subr.mxu0 0.0
        %816 = vmatpush1.msra.mxu0 0.0
        %817 = vmatprep.subr.mxu0 0.0
        %818 = vmatpush1.msra.mxu0 0.0
        %819 = vmatprep.subr.mxu0 0.0
        %820 = vmatpush1.msra.mxu0 0.0
        %821 = vmatprep.subr.mxu0 0.0
        %822 = vmatpush1.msra.mxu0 0.0
        %823 = vmatprep.subr.mxu0 0.0
        %824 = vmatpush1.msra.mxu0 0.0
        %825 = vmatprep.subr.mxu0 0.0
        %826 = vmatpush1.msra.mxu0 0.0
        %827 = vmatprep.subr.mxu0 %v798
        %828 = vmatpush1.msra.mxu0 %v797
        %829 = vmatprep.subr.mxu0 %v796
        %830 = vmatpush1.msra.mxu0 %v795
        %831 = vmatprep.subr.mxu0 0.0
        %832 = vmatpush2.msra.mxu0 0.0
        %833 = vmatprep.subr.mxu0 0.0
        %834 = vmatpush2.msra.mxu0 0.0
        %835 = vmatprep.subr.mxu0 0.0
        %836 = vmatpush2.msra.mxu0 0.0
        %837 = vmatprep.subr.mxu0 0.0
        %838 = vmatpush2.msra.mxu0 0.0
        %839 = vmatprep.subr.mxu0 0.0
        %840 = vmatpush2.msra.mxu0 0.0
        %841 = vmatprep.subr.mxu0 0.0
        %842 = vmatpush2.msra.mxu0 0.0
        %843 = vmatprep.subr.mxu0 0.0
        %844 = vmatpush2.msra.mxu0 0.0
        %845 = vmatprep.subr.mxu0 0.0
        %846 = vmatpush2.msra.mxu0 0.0
        %847 = vmatprep.subr.mxu0 0.0
        %848 = vmatpush2.msra.mxu0 0.0
        %849 = vmatprep.subr.mxu0 0.0
        %850 = vmatpush2.msra.mxu0 0.0
        %851 = vmatprep.subr.mxu0 0.0
        %852 = vmatpush2.msra.mxu0 0.0
        %853 = vmatprep.subr.mxu0 0.0
        %854 = vmatpush2.msra.mxu0 0.0
        %855 = vmatprep.subr.mxu0 0.0
        %856 = vmatpush2.msra.mxu0 0.0
        %857 = vmatprep.subr.mxu0 0.0
        %858 = vmatpush2.msra.mxu0 0.0
        %859 = vmatprep.subr.mxu0 0.0
        %860 = vmatpush2.msra.mxu0 0.0
        %861 = vmatprep.subr.mxu0 0.0
        %862 = vmatpush2.msra.mxu0 0.0
        %863 = vmatprep.mubr.f32.mxu0 0.0
        %864 = vmatmul.mubr.f32.gmra.mxu0 %v536
        %v865 = vpop.f32.mrf.mxu0
        %v866 = vadd.f32 0.0, %v865
        %v867 = vpop.f32.mrf.mxu0
        %v868 = vadd.f32 0.0, %v867
        %869 = vdwg.mxu0
        %v870 = vadd.f32 %v614, %v866
        %v871 = vadd.f32 %v615, %v868
        %s872 = scalar_lea.vmem %s258, 16 [#allocation11]
        %873 = vst [vmem:[%s872] sm:$0xff] %v870
        %874 = vst [vmem:[%s872 + $0x8] sm:$0xff] %v871
        %s875 = scalar_lea.vmem %s222, 32 [#allocation3]
        %v876 = vld [vmem:[%s875] sm:$0xff]
        %v877 = vld [vmem:[%s875 + $0x8] sm:$0xff]
        %v878 = vmax.f32 %v876, 0.0
        %v879 = vmax.f32 %v877, 0.0
        %880 = vrot.lane.b32.xlu0 %v878, 17
        %v881 = vpop.permute.xlu0 %880
        %882 = vrot.lane.b32.xlu0 %v879, 17
        %v883 = vpop.permute.xlu0 %882
        %v884 = vsel %vm278, %v881, %v883
        %v885 = vsel %vm278, %v883, %v881
        %v886 = vmul.f32 %v885, %v284
        %v887 = vmul.f32 %v884, %v288
        %888 = vst [vmem:[#allocation2] sm:$0xff] %v886
        %889 = vst [vmem:[#allocation2 + $0x8] sm:$0xff] %v887
        %890 = vrot.lane.b32.xlu0 %v878, 16
        %v891 = vpop.permute.xlu0 %890
        %892 = vrot.lane.b32.xlu0 %v879, 16
        %v893 = vpop.permute.xlu0 %892
        %v894 = vsel %vm297, %v891, %v893
        %v895 = vsel %vm297, %v893, %v891
        %v896 = vmul.f32 %v895, %v303
        %v897 = vmul.f32 %v894, %v307
        %898 = vst [vmem:[#allocation2 + $0x10] sm:$0xff] %v896
        %899 = vst [vmem:[#allocation2 + $0x18] sm:$0xff] %v897
        %900 = vrot.lane.b32.xlu0 %v878, 15
        %v901 = vpop.permute.xlu0 %900
        %902 = vrot.lane.b32.xlu0 %v879, 15
        %v903 = vpop.permute.xlu0 %902
        %v904 = vsel %vm316, %v901, %v903
        %v905 = vsel %vm316, %v903, %v901
        %v906 = vmul.f32 %v905, %v322
        %v907 = vmul.f32 %v904, %v326
        %908 = vst [vmem:[#allocation2 + $0x20] sm:$0xff] %v906
        %909 = vst [vmem:[#allocation2 + $0x28] sm:$0xff] %v907
        %910 = vrot.lane.b32.xlu0 %v878, 1
        %v911 = vpop.permute.xlu0 %910
        %912 = vrot.lane.b32.xlu0 %v879, 1
        %v913 = vpop.permute.xlu0 %912
        %v914 = vsel %vm335, %v911, %v913
        %v915 = vsel %vm335, %v913, %v911
        %v916 = vmul.f32 %v915, %v341
        %v917 = vmul.f32 %v914, %v345
        %918 = vst [vmem:[#allocation2 + $0x30] sm:$0xff] %v916
        %919 = vst [vmem:[#allocation2 + $0x38] sm:$0xff] %v917
        %920 = vst [vmem:[#allocation2 + $0x40] sm:$0xff] %v878
        %921 = vst [vmem:[#allocation2 + $0x48] sm:$0xff] %v879
        %922 = vrot.lane.b32.xlu0 %v878, 127
        %v923 = vpop.permute.xlu0 %922
        %924 = vrot.lane.b32.xlu0 %v879, 127
        %v925 = vpop.permute.xlu0 %924
        %v926 = vsel %vm356, %v923, %v925
        %v927 = vsel %vm356, %v925, %v923
        %v928 = vmul.f32 %v926, %v362
        %v929 = vmul.f32 %v927, %v366
        %930 = vst [vmem:[#allocation2 + $0x50] sm:$0xff] %v928
        %931 = vst [vmem:[#allocation2 + $0x58] sm:$0xff] %v929
        %932 = vrot.lane.b32.xlu0 %v878, 113
        %v933 = vpop.permute.xlu0 %932
        %934 = vrot.lane.b32.xlu0 %v879, 113
        %v935 = vpop.permute.xlu0 %934
        %v936 = vsel %vm375, %v933, %v935
        %v937 = vsel %vm375, %v935, %v933
        %v938 = vmul.f32 %v936, %v381
        %v939 = vmul.f32 %v937, %v385
        %940 = vst [vmem:[#allocation2 + $0x60] sm:$0xff] %v938
        %941 = vst [vmem:[#allocation2 + $0x68] sm:$0xff] %v939
        %942 = vrot.lane.b32.xlu0 %v878, 112
        %v943 = vpop.permute.xlu0 %942
        %944 = vrot.lane.b32.xlu0 %v879, 112
        %v945 = vpop.permute.xlu0 %944
        %v946 = vsel %vm394, %v943, %v945
        %v947 = vsel %vm394, %v945, %v943
        %v948 = vmul.f32 %v946, %v400
        %v949 = vmul.f32 %v947, %v404
        %950 = vst [vmem:[#allocation2 + $0x70] sm:$0xff] %v948
        %951 = vst [vmem:[#allocation2 + $0x78] sm:$0xff] %v949
        %952 = vrot.lane.b32.xlu0 %v878, 111
        %v953 = vpop.permute.xlu0 %952
        %954 = vrot.lane.b32.xlu0 %v879, 111
        %v955 = vpop.permute.xlu0 %954
        %v956 = vsel %vm413, %v953, %v955
        %v957 = vsel %vm413, %v955, %v953
        %v958 = vmul.f32 %v956, %v419
        %v959 = vmul.f32 %v957, %v423
        %960 = vst [vmem:[#allocation2 + $0x80] sm:$0xff] %v958
        %961 = vst [vmem:[#allocation2 + $0x88] sm:$0xff] %v959
        %v962 = vld [vmem:[#allocation2] sm:$0xff]
        %v963 = vld [vmem:[#allocation2 + $0x8] sm:$0xff]
        %v964 = vld [vmem:[#allocation2 + $0x10] sm:$0xff]
        %v965 = vld [vmem:[#allocation2 + $0x18] sm:$0xff]
        %v966 = vld [vmem:[#allocation2 + $0x20] sm:$0xff]
        %v967 = vld [vmem:[#allocation2 + $0x28] sm:$0xff]
        %v968 = vld [vmem:[#allocation2 + $0x30] sm:$0xff]
        %v969 = vld [vmem:[#allocation2 + $0x38] sm:$0xff]
        %v970 = vld [vmem:[#allocation2 + $0x40] sm:$0xff]
        %v971 = vld [vmem:[#allocation2 + $0x48] sm:$0xff]
        %v972 = vld [vmem:[#allocation2 + $0x50] sm:$0xff]
        %v973 = vld [vmem:[#allocation2 + $0x58] sm:$0xff]
        %v974 = vld [vmem:[#allocation2 + $0x60] sm:$0xff]
        %v975 = vld [vmem:[#allocation2 + $0x68] sm:$0xff]
        %v976 = vld [vmem:[#allocation2 + $0x70] sm:$0xff]
        %v977 = vld [vmem:[#allocation2 + $0x78] sm:$0xff]
        %v978 = vld [vmem:[#allocation2 + $0x80] sm:$0xff]
        %v979 = vld [vmem:[#allocation2 + $0x88] sm:$0xff]
        %980 = vmatprep.subr.mxu0 0.0
        %981 = vmatpush1.msra.mxu0 0.0
        %982 = vmatprep.subr.mxu0 0.0
        %983 = vmatpush1.msra.mxu0 0.0
        %984 = vmatprep.subr.mxu0 0.0
        %985 = vmatpush1.msra.mxu0 0.0
        %986 = vmatprep.subr.mxu0 0.0
        %987 = vmatpush1.msra.mxu0 0.0
        %988 = vmatprep.subr.mxu0 0.0
        %989 = vmatpush1.msra.mxu0 0.0
        %990 = vmatprep.subr.mxu0 0.0
        %991 = vmatpush1.msra.mxu0 0.0
        %992 = vmatprep.subr.mxu0 0.0
        %993 = vmatpush1.msra.mxu0 0.0
        %994 = vmatprep.subr.mxu0 %v979
        %995 = vmatpush1.msra.mxu0 %v978
        %996 = vmatprep.subr.mxu0 %v977
        %997 = vmatpush1.msra.mxu0 %v976
        %998 = vmatprep.subr.mxu0 %v975
        %999 = vmatpush1.msra.mxu0 %v974
        %1000 = vmatprep.subr.mxu0 %v973
        %1001 = vmatpush1.msra.mxu0 %v972
        %1002 = vmatprep.subr.mxu0 %v971
        %1003 = vmatpush1.msra.mxu0 %v970
        %1004 = vmatprep.subr.mxu0 %v969
        %1005 = vmatpush1.msra.mxu0 %v968
        %1006 = vmatprep.subr.mxu0 %v967
        %1007 = vmatpush1.msra.mxu0 %v966
        %1008 = vmatprep.subr.mxu0 %v965
        %1009 = vmatpush1.msra.mxu0 %v964
        %1010 = vmatprep.subr.mxu0 %v963
        %1011 = vmatpush1.msra.mxu0 %v962
        %1012 = vmatprep.subr.mxu0 0.0
        %1013 = vmatpush2.msra.mxu0 0.0
        %1014 = vmatprep.subr.mxu0 0.0
        %1015 = vmatpush2.msra.mxu0 0.0
        %1016 = vmatprep.subr.mxu0 0.0
        %1017 = vmatpush2.msra.mxu0 0.0
        %1018 = vmatprep.subr.mxu0 0.0
        %1019 = vmatpush2.msra.mxu0 0.0
        %1020 = vmatprep.subr.mxu0 0.0
        %1021 = vmatpush2.msra.mxu0 0.0
        %1022 = vmatprep.subr.mxu0 0.0
        %1023 = vmatpush2.msra.mxu0 0.0
        %1024 = vmatprep.subr.mxu0 0.0
        %1025 = vmatpush2.msra.mxu0 0.0
        %1026 = vmatprep.subr.mxu0 0.0
        %1027 = vmatpush2.msra.mxu0 0.0
        %1028 = vmatprep.subr.mxu0 0.0
        %1029 = vmatpush2.msra.mxu0 0.0
        %1030 = vmatprep.subr.mxu0 0.0
        %1031 = vmatpush2.msra.mxu0 0.0
        %1032 = vmatprep.subr.mxu0 0.0
        %1033 = vmatpush2.msra.mxu0 0.0
        %1034 = vmatprep.subr.mxu0 0.0
        %1035 = vmatpush2.msra.mxu0 0.0
        %1036 = vmatprep.subr.mxu0 0.0
        %1037 = vmatpush2.msra.mxu0 0.0
        %1038 = vmatprep.subr.mxu0 0.0
        %1039 = vmatpush2.msra.mxu0 0.0
        %1040 = vmatprep.subr.mxu0 0.0
        %1041 = vmatpush2.msra.mxu0 0.0
        %1042 = vmatprep.subr.mxu0 0.0
        %1043 = vmatpush2.msra.mxu0 0.0
        %1044 = vmatprep.mubr.f32.mxu0 0.0
        %1045 = vmatmul.mubr.f32.gmra.mxu0 %v448
        %v1046 = vpop.f32.mrf.mxu0
        %v1047 = vadd.f32 0.0, %v1046
        %v1048 = vpop.f32.mrf.mxu0
        %v1049 = vadd.f32 0.0, %v1048
        %1050 = vmatprep.mubr.f32.mxu0 0.0
        %1051 = vmatmul.mubr.f32.gmra.mxu0 %v451
        %v1052 = vpop.f32.mrf.mxu0
        %v1053 = vadd.f32 0.0, %v1052
        %v1054 = vpop.f32.mrf.mxu0
        %v1055 = vadd.f32 0.0, %v1054
        %1056 = vdwg.mxu0
        %v1057 = vmax.f32 %v1047, 0.0
        %v1058 = vmax.f32 %v1049, 0.0
        %v1059 = vmax.f32 %v1053, 0.0
        %v1060 = vmax.f32 %v1055, 0.0
        %1061 = vmatprep.subr.mxu0 0.0
        %1062 = vmatpush1.msra.mxu0 0.0
        %1063 = vmatprep.subr.mxu0 0.0
        %1064 = vmatpush1.msra.mxu0 0.0
        %1065 = vmatprep.subr.mxu0 0.0
        %1066 = vmatpush1.msra.mxu0 0.0
        %1067 = vmatprep.subr.mxu0 0.0
        %1068 = vmatpush1.msra.mxu0 0.0
        %1069 = vmatprep.subr.mxu0 0.0
        %1070 = vmatpush1.msra.mxu0 0.0
        %1071 = vmatprep.subr.mxu0 0.0
        %1072 = vmatpush1.msra.mxu0 0.0
        %1073 = vmatprep.subr.mxu0 0.0
        %1074 = vmatpush1.msra.mxu0 0.0
        %1075 = vmatprep.subr.mxu0 0.0
        %1076 = vmatpush1.msra.mxu0 0.0
        %1077 = vmatprep.subr.mxu0 0.0
        %1078 = vmatpush1.msra.mxu0 0.0
        %1079 = vmatprep.subr.mxu0 0.0
        %1080 = vmatpush1.msra.mxu0 0.0
        %1081 = vmatprep.subr.mxu0 0.0
        %1082 = vmatpush1.msra.mxu0 0.0
        %1083 = vmatprep.subr.mxu0 0.0
        %1084 = vmatpush1.msra.mxu0 0.0
        %1085 = vmatprep.subr.mxu0 0.0
        %1086 = vmatpush1.msra.mxu0 0.0
        %1087 = vmatprep.subr.mxu0 0.0
        %1088 = vmatpush1.msra.mxu0 0.0
        %1089 = vmatprep.subr.mxu0 %v1060
        %1090 = vmatpush1.msra.mxu0 %v1059
        %1091 = vmatprep.subr.mxu0 %v1058
        %1092 = vmatpush1.msra.mxu0 %v1057
        %1093 = vmatprep.subr.mxu0 0.0
        %1094 = vmatpush2.msra.mxu0 0.0
        %1095 = vmatprep.subr.mxu0 0.0
        %1096 = vmatpush2.msra.mxu0 0.0
        %1097 = vmatprep.subr.mxu0 0.0
        %1098 = vmatpush2.msra.mxu0 0.0
        %1099 = vmatprep.subr.mxu0 0.0
        %1100 = vmatpush2.msra.mxu0 0.0
        %1101 = vmatprep.subr.mxu0 0.0
        %1102 = vmatpush2.msra.mxu0 0.0
        %1103 = vmatprep.subr.mxu0 0.0
        %1104 = vmatpush2.msra.mxu0 0.0
        %1105 = vmatprep.subr.mxu0 0.0
        %1106 = vmatpush2.msra.mxu0 0.0
        %1107 = vmatprep.subr.mxu0 0.0
        %1108 = vmatpush2.msra.mxu0 0.0
        %1109 = vmatprep.subr.mxu0 0.0
        %1110 = vmatpush2.msra.mxu0 0.0
        %1111 = vmatprep.subr.mxu0 0.0
        %1112 = vmatpush2.msra.mxu0 0.0
        %1113 = vmatprep.subr.mxu0 0.0
        %1114 = vmatpush2.msra.mxu0 0.0
        %1115 = vmatprep.subr.mxu0 0.0
        %1116 = vmatpush2.msra.mxu0 0.0
        %1117 = vmatprep.subr.mxu0 0.0
        %1118 = vmatpush2.msra.mxu0 0.0
        %1119 = vmatprep.subr.mxu0 0.0
        %1120 = vmatpush2.msra.mxu0 0.0
        %1121 = vmatprep.subr.mxu0 0.0
        %1122 = vmatpush2.msra.mxu0 0.0
        %1123 = vmatprep.subr.mxu0 0.0
        %1124 = vmatpush2.msra.mxu0 0.0
        %1125 = vmatprep.mubr.f32.mxu0 0.0
        %1126 = vmatmul.mubr.f32.gmra.mxu0 %v536
        %v1127 = vpop.f32.mrf.mxu0
        %v1128 = vadd.f32 0.0, %v1127
        %v1129 = vpop.f32.mrf.mxu0
        %v1130 = vadd.f32 0.0, %v1129
        %1131 = vdwg.mxu0
        %v1132 = vadd.f32 %v876, %v1128
        %v1133 = vadd.f32 %v877, %v1130
        %s1134 = scalar_lea.vmem %s258, 32 [#allocation11]
        %1135 = vst [vmem:[%s1134] sm:$0xff] %v1132
        %1136 = vst [vmem:[%s1134 + $0x8] sm:$0xff] %v1133
        %s1137 = scalar_lea.vmem %s222, 48 [#allocation3]
        %v1138 = vld [vmem:[%s1137] sm:$0xff]
        %v1139 = vld [vmem:[%s1137 + $0x8] sm:$0xff]
        %v1140 = vmax.f32 %v1138, 0.0
        %v1141 = vmax.f32 %v1139, 0.0
        %1142 = vrot.lane.b32.xlu0 %v1140, 17
        %v1143 = vpop.permute.xlu0 %1142
        %1144 = vrot.lane.b32.xlu0 %v1141, 17
        %v1145 = vpop.permute.xlu0 %1144
        %v1146 = vsel %vm278, %v1143, %v1145
        %v1147 = vsel %vm278, %v1145, %v1143
        %v1148 = vmul.f32 %v1147, %v284
        %v1149 = vmul.f32 %v1146, %v288
        %1150 = vst [vmem:[#allocation2] sm:$0xff] %v1148
        %1151 = vst [vmem:[#allocation2 + $0x8] sm:$0xff] %v1149
        %1152 = vrot.lane.b32.xlu0 %v1140, 16
        %v1153 = vpop.permute.xlu0 %1152
        %1154 = vrot.lane.b32.xlu0 %v1141, 16
        %v1155 = vpop.permute.xlu0 %1154
        %v1156 = vsel %vm297, %v1153, %v1155
        %v1157 = vsel %vm297, %v1155, %v1153
        %v1158 = vmul.f32 %v1157, %v303
        %v1159 = vmul.f32 %v1156, %v307
        %1160 = vst [vmem:[#allocation2 + $0x10] sm:$0xff] %v1158
        %1161 = vst [vmem:[#allocation2 + $0x18] sm:$0xff] %v1159
        %1162 = vrot.lane.b32.xlu0 %v1140, 15
        %v1163 = vpop.permute.xlu0 %1162
        %1164 = vrot.lane.b32.xlu0 %v1141, 15
        %v1165 = vpop.permute.xlu0 %1164
        %v1166 = vsel %vm316, %v1163, %v1165
        %v1167 = vsel %vm316, %v1165, %v1163
        %v1168 = vmul.f32 %v1167, %v322
        %v1169 = vmul.f32 %v1166, %v326
        %1170 = vst [vmem:[#allocation2 + $0x20] sm:$0xff] %v1168
        %1171 = vst [vmem:[#allocation2 + $0x28] sm:$0xff] %v1169
        %1172 = vrot.lane.b32.xlu0 %v1140, 1
        %v1173 = vpop.permute.xlu0 %1172
        %1174 = vrot.lane.b32.xlu0 %v1141, 1
        %v1175 = vpop.permute.xlu0 %1174
        %v1176 = vsel %vm335, %v1173, %v1175
        %v1177 = vsel %vm335, %v1175, %v1173
        %v1178 = vmul.f32 %v1177, %v341
        %v1179 = vmul.f32 %v1176, %v345
        %1180 = vst [vmem:[#allocation2 + $0x30] sm:$0xff] %v1178
        %1181 = vst [vmem:[#allocation2 + $0x38] sm:$0xff] %v1179
        %1182 = vst [vmem:[#allocation2 + $0x40] sm:$0xff] %v1140
        %1183 = vst [vmem:[#allocation2 + $0x48] sm:$0xff] %v1141
        %1184 = vrot.lane.b32.xlu0 %v1140, 127
        %v1185 = vpop.permute.xlu0 %1184
        %1186 = vrot.lane.b32.xlu0 %v1141, 127
        %v1187 = vpop.permute.xlu0 %1186
        %v1188 = vsel %vm356, %v1185, %v1187
        %v1189 = vsel %vm356, %v1187, %v1185
        %v1190 = vmul.f32 %v1188, %v362
        %v1191 = vmul.f32 %v1189, %v366
        %1192 = vst [vmem:[#allocation2 + $0x50] sm:$0xff] %v1190
        %1193 = vst [vmem:[#allocation2 + $0x58] sm:$0xff] %v1191
        %1194 = vrot.lane.b32.xlu0 %v1140, 113
        %v1195 = vpop.permute.xlu0 %1194
        %1196 = vrot.lane.b32.xlu0 %v1141, 113
        %v1197 = vpop.permute.xlu0 %1196
        %v1198 = vsel %vm375, %v1195, %v1197
        %v1199 = vsel %vm375, %v1197, %v1195
        %v1200 = vmul.f32 %v1198, %v381
        %v1201 = vmul.f32 %v1199, %v385
        %1202 = vst [vmem:[#allocation2 + $0x60] sm:$0xff] %v1200
        %1203 = vst [vmem:[#allocation2 + $0x68] sm:$0xff] %v1201
        %1204 = vrot.lane.b32.xlu0 %v1140, 112
        %v1205 = vpop.permute.xlu0 %1204
        %1206 = vrot.lane.b32.xlu0 %v1141, 112
        %v1207 = vpop.permute.xlu0 %1206
        %v1208 = vsel %vm394, %v1205, %v1207
        %v1209 = vsel %vm394, %v1207, %v1205
        %v1210 = vmul.f32 %v1208, %v400
        %v1211 = vmul.f32 %v1209, %v404
        %1212 = vst [vmem:[#allocation2 + $0x70] sm:$0xff] %v1210
        %1213 = vst [vmem:[#allocation2 + $0x78] sm:$0xff] %v1211
        %1214 = vrot.lane.b32.xlu0 %v1140, 111
        %v1215 = vpop.permute.xlu0 %1214
        %1216 = vrot.lane.b32.xlu0 %v1141, 111
        %v1217 = vpop.permute.xlu0 %1216
        %v1218 = vsel %vm413, %v1215, %v1217
        %v1219 = vsel %vm413, %v1217, %v1215
        %v1220 = vmul.f32 %v1218, %v419
        %v1221 = vmul.f32 %v1219, %v423
        %1222 = vst [vmem:[#allocation2 + $0x80] sm:$0xff] %v1220
        %1223 = vst [vmem:[#allocation2 + $0x88] sm:$0xff] %v1221
        %v1224 = vld [vmem:[#allocation2] sm:$0xff]
        %v1225 = vld [vmem:[#allocation2 + $0x8] sm:$0xff]
        %v1226 = vld [vmem:[#allocation2 + $0x10] sm:$0xff]
        %v1227 = vld [vmem:[#allocation2 + $0x18] sm:$0xff]
        %v1228 = vld [vmem:[#allocation2 + $0x20] sm:$0xff]
        %v1229 = vld [vmem:[#allocation2 + $0x28] sm:$0xff]
        %v1230 = vld [vmem:[#allocation2 + $0x30] sm:$0xff]
        %v1231 = vld [vmem:[#allocation2 + $0x38] sm:$0xff]
        %v1232 = vld [vmem:[#allocation2 + $0x40] sm:$0xff]
        %v1233 = vld [vmem:[#allocation2 + $0x48] sm:$0xff]
        %v1234 = vld [vmem:[#allocation2 + $0x50] sm:$0xff]
        %v1235 = vld [vmem:[#allocation2 + $0x58] sm:$0xff]
        %v1236 = vld [vmem:[#allocation2 + $0x60] sm:$0xff]
        %v1237 = vld [vmem:[#allocation2 + $0x68] sm:$0xff]
        %v1238 = vld [vmem:[#allocation2 + $0x70] sm:$0xff]
        %v1239 = vld [vmem:[#allocation2 + $0x78] sm:$0xff]
        %v1240 = vld [vmem:[#allocation2 + $0x80] sm:$0xff]
        %v1241 = vld [vmem:[#allocation2 + $0x88] sm:$0xff]
        %1242 = vmatprep.subr.mxu0 0.0
        %1243 = vmatpush1.msra.mxu0 0.0
        %1244 = vmatprep.subr.mxu0 0.0
        %1245 = vmatpush1.msra.mxu0 0.0
        %1246 = vmatprep.subr.mxu0 0.0
        %1247 = vmatpush1.msra.mxu0 0.0
        %1248 = vmatprep.subr.mxu0 0.0
        %1249 = vmatpush1.msra.mxu0 0.0
        %1250 = vmatprep.subr.mxu0 0.0
        %1251 = vmatpush1.msra.mxu0 0.0
        %1252 = vmatprep.subr.mxu0 0.0
        %1253 = vmatpush1.msra.mxu0 0.0
        %1254 = vmatprep.subr.mxu0 0.0
        %1255 = vmatpush1.msra.mxu0 0.0
        %1256 = vmatprep.subr.mxu0 %v1241
        %1257 = vmatpush1.msra.mxu0 %v1240
        %1258 = vmatprep.subr.mxu0 %v1239
        %1259 = vmatpush1.msra.mxu0 %v1238
        %1260 = vmatprep.subr.mxu0 %v1237
        %1261 = vmatpush1.msra.mxu0 %v1236
        %1262 = vmatprep.subr.mxu0 %v1235
        %1263 = vmatpush1.msra.mxu0 %v1234
        %1264 = vmatprep.subr.mxu0 %v1233
        %1265 = vmatpush1.msra.mxu0 %v1232
        %1266 = vmatprep.subr.mxu0 %v1231
        %1267 = vmatpush1.msra.mxu0 %v1230
        %1268 = vmatprep.subr.mxu0 %v1229
        %1269 = vmatpush1.msra.mxu0 %v1228
        %1270 = vmatprep.subr.mxu0 %v1227
        %1271 = vmatpush1.msra.mxu0 %v1226
        %1272 = vmatprep.subr.mxu0 %v1225
        %1273 = vmatpush1.msra.mxu0 %v1224
        %1274 = vmatprep.subr.mxu0 0.0
        %1275 = vmatpush2.msra.mxu0 0.0
        %1276 = vmatprep.subr.mxu0 0.0
        %1277 = vmatpush2.msra.mxu0 0.0
        %1278 = vmatprep.subr.mxu0 0.0
        %1279 = vmatpush2.msra.mxu0 0.0
        %1280 = vmatprep.subr.mxu0 0.0
        %1281 = vmatpush2.msra.mxu0 0.0
        %1282 = vmatprep.subr.mxu0 0.0
        %1283 = vmatpush2.msra.mxu0 0.0
        %1284 = vmatprep.subr.mxu0 0.0
        %1285 = vmatpush2.msra.mxu0 0.0
        %1286 = vmatprep.subr.mxu0 0.0
        %1287 = vmatpush2.msra.mxu0 0.0
        %1288 = vmatprep.subr.mxu0 0.0
        %1289 = vmatpush2.msra.mxu0 0.0
        %1290 = vmatprep.subr.mxu0 0.0
        %1291 = vmatpush2.msra.mxu0 0.0
        %1292 = vmatprep.subr.mxu0 0.0
        %1293 = vmatpush2.msra.mxu0 0.0
        %1294 = vmatprep.subr.mxu0 0.0
        %1295 = vmatpush2.msra.mxu0 0.0
        %1296 = vmatprep.subr.mxu0 0.0
        %1297 = vmatpush2.msra.mxu0 0.0
        %1298 = vmatprep.subr.mxu0 0.0
        %1299 = vmatpush2.msra.mxu0 0.0
        %1300 = vmatprep.subr.mxu0 0.0
        %1301 = vmatpush2.msra.mxu0 0.0
        %1302 = vmatprep.subr.mxu0 0.0
        %1303 = vmatpush2.msra.mxu0 0.0
        %1304 = vmatprep.subr.mxu0 0.0
        %1305 = vmatpush2.msra.mxu0 0.0
        %1306 = vmatprep.mubr.f32.mxu0 0.0
        %1307 = vmatmul.mubr.f32.gmra.mxu0 %v448
        %v1308 = vpop.f32.mrf.mxu0
        %v1309 = vadd.f32 0.0, %v1308
        %v1310 = vpop.f32.mrf.mxu0
        %v1311 = vadd.f32 0.0, %v1310
        %1312 = vmatprep.mubr.f32.mxu0 0.0
        %1313 = vmatmul.mubr.f32.gmra.mxu0 %v451
        %v1314 = vpop.f32.mrf.mxu0
        %v1315 = vadd.f32 0.0, %v1314
        %v1316 = vpop.f32.mrf.mxu0
        %v1317 = vadd.f32 0.0, %v1316
        %1318 = vdwg.mxu0
        %v1319 = vmax.f32 %v1309, 0.0
        %v1320 = vmax.f32 %v1311, 0.0
        %v1321 = vmax.f32 %v1315, 0.0
        %v1322 = vmax.f32 %v1317, 0.0
        %1323 = vmatprep.subr.mxu0 0.0
        %1324 = vmatpush1.msra.mxu0 0.0
        %1325 = vmatprep.subr.mxu0 0.0
        %1326 = vmatpush1.msra.mxu0 0.0
        %1327 = vmatprep.subr.mxu0 0.0
        %1328 = vmatpush1.msra.mxu0 0.0
        %1329 = vmatprep.subr.mxu0 0.0
        %1330 = vmatpush1.msra.mxu0 0.0
        %1331 = vmatprep.subr.mxu0 0.0
        %1332 = vmatpush1.msra.mxu0 0.0
        %1333 = vmatprep.subr.mxu0 0.0
        %1334 = vmatpush1.msra.mxu0 0.0
        %1335 = vmatprep.subr.mxu0 0.0
        %1336 = vmatpush1.msra.mxu0 0.0
        %1337 = vmatprep.subr.mxu0 0.0
        %1338 = vmatpush1.msra.mxu0 0.0
        %1339 = vmatprep.subr.mxu0 0.0
        %1340 = vmatpush1.msra.mxu0 0.0
        %1341 = vmatprep.subr.mxu0 0.0
        %1342 = vmatpush1.msra.mxu0 0.0
        %1343 = vmatprep.subr.mxu0 0.0
        %1344 = vmatpush1.msra.mxu0 0.0
        %1345 = vmatprep.subr.mxu0 0.0
        %1346 = vmatpush1.msra.mxu0 0.0
        %1347 = vmatprep.subr.mxu0 0.0
        %1348 = vmatpush1.msra.mxu0 0.0
        %1349 = vmatprep.subr.mxu0 0.0
        %1350 = vmatpush1.msra.mxu0 0.0
        %1351 = vmatprep.subr.mxu0 %v1322
        %1352 = vmatpush1.msra.mxu0 %v1321
        %1353 = vmatprep.subr.mxu0 %v1320
        %1354 = vmatpush1.msra.mxu0 %v1319
        %1355 = vmatprep.subr.mxu0 0.0
        %1356 = vmatpush2.msra.mxu0 0.0
        %1357 = vmatprep.subr.mxu0 0.0
        %1358 = vmatpush2.msra.mxu0 0.0
        %1359 = vmatprep.subr.mxu0 0.0
        %1360 = vmatpush2.msra.mxu0 0.0
        %1361 = vmatprep.subr.mxu0 0.0
        %1362 = vmatpush2.msra.mxu0 0.0
        %1363 = vmatprep.subr.mxu0 0.0
        %1364 = vmatpush2.msra.mxu0 0.0
        %1365 = vmatprep.subr.mxu0 0.0
        %1366 = vmatpush2.msra.mxu0 0.0
        %1367 = vmatprep.subr.mxu0 0.0
        %1368 = vmatpush2.msra.mxu0 0.0
        %1369 = vmatprep.subr.mxu0 0.0
        %1370 = vmatpush2.msra.mxu0 0.0
        %1371 = vmatprep.subr.mxu0 0.0
        %1372 = vmatpush2.msra.mxu0 0.0
        %1373 = vmatprep.subr.mxu0 0.0
        %1374 = vmatpush2.msra.mxu0 0.0
        %1375 = vmatprep.subr.mxu0 0.0
        %1376 = vmatpush2.msra.mxu0 0.0
        %1377 = vmatprep.subr.mxu0 0.0
        %1378 = vmatpush2.msra.mxu0 0.0
        %1379 = vmatprep.subr.mxu0 0.0
        %1380 = vmatpush2.msra.mxu0 0.0
        %1381 = vmatprep.subr.mxu0 0.0
        %1382 = vmatpush2.msra.mxu0 0.0
        %1383 = vmatprep.subr.mxu0 0.0
        %1384 = vmatpush2.msra.mxu0 0.0
        %1385 = vmatprep.subr.mxu0 0.0
        %1386 = vmatpush2.msra.mxu0 0.0
        %1387 = vmatprep.mubr.f32.mxu0 0.0
        %1388 = vmatmul.mubr.f32.gmra.mxu0 %v536
        %v1389 = vpop.f32.mrf.mxu0
        %v1390 = vadd.f32 0.0, %v1389
        %v1391 = vpop.f32.mrf.mxu0
        %v1392 = vadd.f32 0.0, %v1391
        %1393 = vdwg.mxu0
        %v1394 = vadd.f32 %v1138, %v1390
        %v1395 = vadd.f32 %v1139, %v1392
        %s1396 = scalar_lea.vmem %s258, 48 [#allocation11]
        %1397 = vst [vmem:[%s1396] sm:$0xff] %v1394
        %1398 = vst [vmem:[%s1396 + $0x8] sm:$0xff] %v1395
        %s1399 = sand.u32 %s120, 1
        %s1400 = scalar_lea.sflag [#allocation5], %s1399
        %s1401 = sand.u32 %s120, 1
        %s1402 = smul.addr %s1401, 64
        %s1403 = scalar_lea.vmem [#allocation11], %s1402
        // Predicated region
        $region53: #{tpu_custom_call.1} parent=35 // pred_check
          %p1404 = pneg %p130
        $region54: #{tpu_custom_call.1} parent=35 // pred_check_branch
          %1406 = sbr.rel (%p1404) target = $region56
        $region55: #{tpu_custom_call.1} parent=35 // pred_region
          %s1407 = smul.u32 4, %s23
          %s1409 = ssub.s32 1024, 1024
          %1410 = vsyncadd %s1400, %s1409
          %s1411 = smul.addr %s1407, 2
          %s1412 = smul.addr %s1411, 128
          %s1413 = scalar_lea.hbm %s4, %s1412
          %s1414 = sshll.u32 %s1403, 4
          %s1415 = int_to_ptr.vmem [resolvable:$true] %s1414
          %1420 = dma.vmem_to_hbm [thread:$0]  %s1415, 1024, %s1413, %s1400, 256, 256, 16
        $region56: #{tpu_custom_call.1} parent=35 // pred_fallthru
          _
      $region36: #{tpu_custom_call.1} parent=5 // pred_fallthru
        _
      %p1421 = scmp.le.s32.totalorder 2, %s18
      // Predicated region
      $region57: #{tpu_custom_call.1} parent=5 // pred_check
        %p1422 = pneg %p1421
      $region58: #{tpu_custom_call.1} parent=5 // pred_check_branch
        %1424 = sbr.rel (%p1422) target = $region60
      $region59: #{tpu_custom_call.1} parent=5 // pred_region
        %s1425 = ssub.s32 %s18, 2
        // Predicated region
        $region61: #{tpu_custom_call.1} parent=59 // pred_check
          %p1426 = pneg %p136
        $region62: #{tpu_custom_call.1} parent=59 // pred_check_branch
          %1428 = sbr.rel (%p1426) target = $region64
        $region63: #{tpu_custom_call.1} parent=59 // pred_region
          %s1429 = sand.u32 %s121, 1
          %s1430 = scalar_lea.sflag [#allocation5], %s1429
          %s1431 = sand.u32 %s121, 1
          %s1432 = smul.addr %s1431, 64
          %s1433 = scalar_lea.vmem [#allocation11], %s1432
          %1434 = dma.done %s1430, 1024
        $region64: #{tpu_custom_call.1} parent=59 // pred_fallthru
          _
      $region60: #{tpu_custom_call.1} parent=5 // pred_fallthru
        _
    $region6: #{tpu_custom_call.1} parent=1 // loop_footer
      %s22 = sadd.s32 1, %s18
    $region7: #{tpu_custom_call.1} parent=1 // loop_footer_branch
      %17 = sbr.rel target = $region3
    $region8: #{tpu_custom_call.1} parent=1 // loop_exit
      _
    %1435 = vsyncpa [#allocation4], 1
    %s1436 = scalar_lea.sflag [#allocation4], 1
    %1437 = vsyncpa %s1436, 1
    %1438 = vsyncpa [#allocation7], 1
    %1439 = vsyncpa [#allocation10], 1
    %1440 = vsyncpa [#allocation5], 1
    %s1441 = scalar_lea.sflag [#allocation5], 1
    %1442 = vsyncpa %s1441, 1

</llo_original>
